<compile_context>
chip_gen: v7x
topology: tpu7x:2x2x1
jax: 0.10.0
libtpu: 0.0.40
codegen_flags: <defaults>
</compile_context>

<pallas_src>
import math

import numpy as np
import jax
import jax.numpy as jnp
from jax.experimental import pallas as pl
from jax.experimental.pallas import tpu as pltpu


CODE_LANES = 128   # carried feature code padded to one full vreg of lanes
FE = 128           # fused layer-2 output width: [feat code | se | zeros...]


# ----------------------------------------------------------------------------
# Kernel
# ----------------------------------------------------------------------------
def _hier_recon_kernel(levels_ref, xi0_ref, stdz_ref,
                       wcat_ref, bcat_ref, w2_ref, b2_ref, wbd_ref, bbd_ref,
                       dist_ref, featse_ref,
                       code_sc):
    l = pl.program_id(1)                                   # level axis (carried)
    sh = wbd_ref.shape[0]                                  # S*H

    @pl.when(l == 0)
    def _():
        code_sc[...] = xi0_ref[...]                        # (Tn, 128) f32

    code = code_sc[...]                                    # (Tn, 128) f32
    active = levels_ref[...] > l                           # (Tn, 1) bool

    # Fused layer 1 -> pre-activation columns
    #   [ mean (S*H, tiled per sample) | sigma (S*H) | se hidden (H) | feat hidden (H) ]
    h_cat = (jnp.dot(code.astype(jnp.bfloat16), wcat_ref[...],
                     preferred_element_type=jnp.float32) + bcat_ref[...])

    # ReLU over ALL lanes is safe: the mean/sigma lane groups only feed all-zero
    # rows of the fused second-layer weight; hat_mean / hat_sigma are read from
    # the pre-activation h_cat below.
    h_act = jnp.maximum(h_cat, 0.0)

    # Fused layer 2: out lanes [0:H) = sg_feat_decoder(code), lane H = se_decoder(code).
    out2 = (jnp.dot(h_act.astype(jnp.bfloat16), w2_ref[...],
                    preferred_element_type=jnp.float32) + b2_ref[...])       # (Tn, 128)

    # Reparameterized sample in lane-dense (S*H) layout; exp/mul in f32 (v5e-safe).
    hat_mean = h_cat[:, :sh]                               # (Tn, S*H) f32, vreg-aligned
    hat_sigma = h_cat[:, sh:2 * sh]                        # (Tn, S*H) f32, vreg-aligned
    std_z = stdz_ref[0].astype(jnp.float32)                # (Tn, S*H)
    var = hat_mean + jnp.exp(hat_sigma) * std_z            # (Tn, S*H)

    # Block-diagonal sg_dist_decoder: one matmul -> lane-dense (S*E) output row.
    recon_sg = (jnp.dot(var.astype(jnp.bfloat16), wbd_ref[...],
                        preferred_element_type=jnp.float32) + bbd_ref[...])  # (Tn, S*E)
    # NOTE: sum_neighbor_norm in the reference is dead code -> not computed.

    # Per-level output blocks (writeback double-buffered by Pallas); padded
    # (node, level) slots are sliced off host-side -> no masking on the stores.
    dist_ref[0] = recon_sg
    featse_ref[0] = out2

    # Carry the full 128-lane out2 row (extra lanes hit zero rows of w_cat);
    # freeze the code once a node has run out of levels.
    code_sc[...] = jnp.where(active, out2, code)


# ----------------------------------------------------------------------------
# Host-side parameter fusion (done once, outside the kernel)
# ----------------------------------------------------------------------------
def _round_up(x, m):
    return ((x + m - 1) // m) * m


def fuse_params(params, sample_size):
    """Fuse the 7 Linear layers into 3 matmuls' worth of weights.

    Returns (w_cat (128, 2*S*H + 2*H) bf16, b_cat f32,
             w2    (2*S*H + 2*H, 128) bf16, b2    f32,
             w_bd  (S*H, S*E)         bf16, b_bd  f32).

    w_cat output columns: [mean tiled S times | sigma tiled S times | se hid | feat hid]
    (mean/sigma come out pre-tiled across samples -> no in-kernel lane tiling).
    w2 output columns: [0:H) = sg_feat_decoder layer-2, [H] = se_decoder layer-2.
    w_bd is block-diagonal with S copies of sg_dist_decoder's weight.
    """
    (w_se1, b_se1, w_se2, b_se2,
     w_m, b_m, w_s, b_s, w_d, b_d,
     w_f1, b_f1, w_f2, b_f2) = params
    h = w_se1.shape[0]
    e = w_d.shape[1]
    s = sample_size
    sh, se_w = s * h, s * e
    assert h + 1 <= FE and h <= CODE_LANES

    # Layer-1 fused weight; code-input rows [h:128) are zero (carried lanes > H
    # hold [se, 0...] and must not contribute).
    w_cat = jnp.zeros((CODE_LANES, 2 * sh + 2 * h), jnp.float32)
    w_cat = w_cat.at[:h, 0:sh].set(jnp.tile(w_m, (1, s)))
    w_cat = w_cat.at[:h, sh:2 * sh].set(jnp.tile(w_s, (1, s)))
    w_cat = w_cat.at[:h, 2 * sh:2 * sh + h].set(w_se1)
    w_cat = w_cat.at[:h, 2 * sh + h:].set(w_f1)
    b_cat = jnp.concatenate(
        [jnp.tile(b_m, (1, s)), jnp.tile(b_s, (1, s)), b_se1, b_f1], axis=1)

    # Layer-2 fused weight: only the (relu'd) se/feat hidden rows are non-zero.
    w2 = jnp.zeros((2 * sh + 2 * h, FE), jnp.float32)
    w2 = w2.at[2 * sh:2 * sh + h, h:h + 1].set(w_se2)   # se path
    w2 = w2.at[2 * sh + h:, 0:h].set(w_f2)              # feat path
    b2 = jnp.zeros((1, FE), jnp.float32)
    b2 = b2.at[:, 0:h].set(b_f2)
    b2 = b2.at[:, h:h + 1].set(b_se2)

    # Block-diagonal sg_dist_decoder: var lanes [i*H:(i+1)*H) -> out lanes [i*E:(i+1)*E).
    w_bd = jnp.zeros((sh, se_w), jnp.float32)
    for i in range(s):
        w_bd = w_bd.at[i * h:(i + 1) * h, i * e:(i + 1) * e].set(w_d)
    b_bd = jnp.tile(b_d, (1, s))

    return (w_cat.astype(jnp.bfloat16), b_cat,
            w2.astype(jnp.bfloat16), b2,
            w_bd.astype(jnp.bfloat16), b_bd)


# ----------------------------------------------------------------------------
# pallas_call wrapper
# ----------------------------------------------------------------------------
def _hier_recon_batched(levels, xi0, std_z, fused, *, tile_n):
    w_cat, b_cat, w2, b2, w_bd, b_bd = fused
    lmax, n_pad, sh = std_z.shape
    se_w = w_bd.shape[1]
    nt = n_pad // tile_n

    def const_spec(a):
        nd = a.ndim
        return pl.BlockSpec(a.shape, lambda t, l, _nd=nd: (0,) * _nd)

    in_specs = [
        pl.BlockSpec((tile_n, 1), lambda t, l: (t, 0)),            # per-node level count
        pl.BlockSpec((tile_n, CODE_LANES), lambda t, l: (t, 0)),   # initial code (padded)
        pl.BlockSpec((1, tile_n, sh), lambda t, l: (l, t, 0)),     # per (tile, level) noise
        const_spec(w_cat), const_spec(b_cat),
        const_spec(w2), const_spec(b2),
        const_spec(w_bd), const_spec(b_bd),
    ]
    # Per-level blocked outputs: writeback overlaps the next level's compute.
    out_specs = [
        pl.BlockSpec((1, tile_n, se_w), lambda t, l: (l, t, 0)),
        pl.BlockSpec((1, tile_n, FE), lambda t, l: (l, t, 0)),
    ]
    # TODO(synk): allow bf16 outputs here if the downstream loss tolerates it
    # (halves the dominant output stream as well).
    out_shape = (
        jax.ShapeDtypeStruct((lmax, n_pad, se_w), jnp.float32),    # sg_dist (flattened S*E)
        jax.ShapeDtypeStruct((lmax, n_pad, FE), jnp.float32),      # [feat | se | 0...]
    )

    c1 = w_cat.shape[1]
    flops = lmax * n_pad * 2 * (CODE_LANES * c1 + c1 * FE + sh * se_w)
    bytes_accessed = int(
        sum(int(a.size) * a.dtype.itemsize
            for a in (levels, xi0, std_z, w_cat, b_cat, w2, b2, w_bd, b_bd))
        + lmax * n_pad * (se_w + FE) * 4)
    cost = pl.CostEstimate(flops=flops, transcendentals=lmax * n_pad * sh,
                           bytes_accessed=bytes_accessed)

    grid_spec = pltpu.PrefetchScalarGridSpec(
        num_scalar_prefetch=0,
        grid=(nt, lmax),                                           # node tiles x levels
        in_specs=in_specs,
        out_specs=out_specs,
        scratch_shapes=[pltpu.VMEM((tile_n, CODE_LANES), jnp.float32)],  # carried code
    )

    # TODO(synk): for single-digit N and lmax <= ~8 the per-grid-step overhead
    # dominates; a variant that collapses the level loop into an unrolled
    # lax.fori_loop over a resident std_z block would remove it.
    return pl.pallas_call(
        _hier_recon_kernel,
        out_shape=out_shape,
        grid_spec=grid_spec,
        compiler_params=pltpu.CompilerParams(
            dimension_semantics=("parallel", "arbitrary")),        # nodes || , levels carried
        cost_estimate=cost,
    )(levels, xi0, std_z, w_cat, b_cat, w2, b2, w_bd, b_bd)


# ----------------------------------------------------------------------------
# Forward wrapper (mirrors Hier_Recon.forward)
# ----------------------------------------------------------------------------
def hier_recon_forward(hid_x, hid_x_idx, params, recon_len, std_z):
    """Returns (sg_dist_list, sg_feat_list, se_list); per node i the stacked
    per-level arrays use index 0 == last computed level (insert(0, ...) order):
       sg_dist: (L_i, 1, S, E), sg_feat: (L_i, 1, H), se: (L_i, 1, 1)."""
    idx = [int(i) for i in hid_x_idx]
    ls = [len(recon_len[i]) for i in idx]
    lmax, n = max(ls), len(idx)
    h = hid_x.shape[1]
    s = std_z.shape[2]
    e = params[8].shape[1]                                  # sg_dist_decoder out dim
    assert std_z.shape[:2] == (lmax, n) and std_z.shape[3] == h

    # Node tiling: multiple of 8 (sublane), capped so per-tile VMEM stays small.
    tile_n = min(256, _round_up(n, 8))
    n_pad = _round_up(n, tile_n)

    xi0 = jnp.zeros((n_pad, CODE_LANES), jnp.float32)
    xi0 = xi0.at[:n, :h].set(hid_x[jnp.asarray(idx)])
    levels = jnp.zeros((n_pad, 1), jnp.int32).at[:n, 0].set(jnp.asarray(ls, jnp.int32))
    # Lane-dense (S*H) noise layout, bf16 (dominant HBM input stream).
    stdz_flat = jnp.zeros((lmax, n_pad, s * h), jnp.bfloat16)
    stdz_flat = stdz_flat.at[:, :n].set(
        std_z.reshape(lmax, n, s * h).astype(jnp.bfloat16))

    fused = fuse_params(params, s)
    dist_all, featse_all = _hier_recon_batched(levels, xi0, stdz_flat, fused,
                                               tile_n=tile_n)

    sg_dist_list, sg_feat_list, se_list = [], [], []
    for p, L in enumerate(ls):
        d = dist_all[:L, p].reshape(L, s, e)[::-1][:, None]            # (L, 1, S, E)
        sg_dist_list.append(d)
        sg_feat_list.append(featse_all[:L, p, :h][::-1][:, None, :])   # (L, 1, H)
        se_list.append(featse_all[:L, p, h:h + 1][::-1][:, None, :])   # (L, 1, 1)
    return sg_dist_list, sg_feat_list, se_list


# ----------------------------------------------------------------------------
# Parameter init (nn.Linear-style; weights stored as (in, out)) + pure-JAX ref
# ----------------------------------------------------------------------------
def init_params(key, H, E):
    def lin(k, din, dout):
        kw, kb = jax.random.split(k)
        bound = 1.0 / math.sqrt(din)
        w = jax.random.uniform(kw, (din, dout), minval=-bound, maxval=bound,
                               dtype=jnp.float32)
        b = jax.random.uniform(kb, (1, dout), minval=-bound, maxval=bound,
                               dtype=jnp.float32)
        return w, b

    ks = jax.random.split(key, 7)
    w_se1, b_se1 = lin(ks[0], H, H)   # se_decoder layer 1
    w_se2, b_se2 = lin(ks[1], H, 1)   # se_decoder layer 2
    w_m,   b_m   = lin(ks[2], H, H)   # sg_dist_mean_decoder
    w_s,   b_s   = lin(ks[3], H, H)   # sg_dist_sigma_decoder
    w_d,   b_d   = lin(ks[4], H, E)   # sg_dist_decoder
    w_f1,  b_f1  = lin(ks[5], H, H)   # sg_feat_decoder layer 1
    w_f2,  b_f2  = lin(ks[6], H, H)   # sg_feat_decoder layer 2
    return (w_se1, b_se1, w_se2, b_se2,
            w_m, b_m, w_s, b_s, w_d, b_d,
            w_f1, b_f1, w_f2, b_f2)


def _reference_forward(hid_x, hid_x_idx, params, recon_len, std_z):
    """Unfused pure-JAX f32 reference (same math as the PyTorch module, eval mode)."""
    (w_se1, b_se1, w_se2, b_se2, w_m, b_m, w_s, b_s, w_d, b_d,
     w_f1, b_f1, w_f2, b_f2) = params
    hi = jax.lax.Precision.HIGHEST
    dot = lambda a, b: jnp.dot(a, b, precision=hi)

    sg_dist_list, sg_feat_list, se_list = [], [], []
    for p, i in enumerate(int(j) for j in hid_x_idx):
        code = hid_x[i][None, :]
        d_i, f_i, s_i = [], [], []
        for l in range(len(recon_len[i])):
            recon_se = dot(jnp.maximum(dot(code, w_se1) + b_se1, 0.0), w_se2) + b_se2
            hat_mean = dot(code, w_m) + b_m
            hat_sigma = dot(code, w_s) + b_s
            var = hat_mean + jnp.exp(hat_sigma) * std_z[l, p]
            recon_sg = dot(var, w_d) + b_d
            code = dot(jnp.maximum(dot(code, w_f1) + b_f1, 0.0), w_f2) + b_f2
            d_i.insert(0, recon_sg[None])
            f_i.insert(0, code)
            s_i.insert(0, recon_se)
        sg_dist_list.append(jnp.stack(d_i))
        sg_feat_list.append(jnp.stack(f_i))
        se_list.append(jnp.stack(s_i))
    return sg_dist_list, sg_feat_list, se_list


# ----------------------------------------------------------------------------
if __name__ == "__main__":
    H, E, S = 32, 16, 8          # hid_dim, output_edge_dim, sample_size (S*E = 128)
    N_total = 4                  # number of node codes in hid_x
    recon_len = {0: [0, 1, 2], 1: [0, 1], 2: [0, 1, 2, 3], 3: [0]}
    hid_x_idx = [0, 2]

    key = jax.random.PRNGKey(0)
    k_x, k_p, k_z = jax.random.split(key, 3)
    hid_x = jax.random.normal(k_x, (N_total, H), dtype=jnp.float32)
    params = init_params(k_p, H, E)

    ls = [len(recon_len[i]) for i in hid_x_idx]
    lmax, n = max(ls), len(hid_x_idx)
    std_z = jax.random.normal(k_z, (lmax, n, S, H), dtype=jnp.float32)

    sg_dist_list, sg_feat_list, se_list = hier_recon_forward(
        hid_x, hid_x_idx, params, recon_len, std_z)
    jax.block_until_ready((sg_dist_list, sg_feat_list, se_list))

    # shape checks (same contract as the previous version)
    assert sg_dist_list[0].shape == (3, 1, S, E)
    assert sg_feat_list[1].shape == (4, 1, H)
    assert se_list[0].shape == (3, 1, 1)

    # numeric check against the unfused pure-JAX f32 reference; tolerance is
    # sized for the bf16 weight/noise data path (exp-amplified outliers).
    ref_dist, ref_feat, ref_se = _reference_forward(
        hid_x, hid_x_idx, params, recon_len, std_z)
    for got, ref in zip(sg_dist_list + sg_feat_list + se_list,
                        ref_dist + ref_feat + ref_se):
        np.testing.assert_allclose(np.asarray(got), np.asarray(ref),
                                   rtol=1e-1, atol=1e-1)

    print("KERNEL_OK")
</pallas_src>

<mosaic_0001>
module attributes {stable_mosaic.version = 11 : i64} {
  func.func @_hier_recon_kernel(%arg0: i32, %arg1: i32, %arg2: memref<8x1xi32, #tpu.memory_space<vmem>>, %arg3: memref<8x128xf32, #tpu.memory_space<vmem>>, %arg4: memref<1x8x256xbf16, #tpu.memory_space<vmem>>, %arg5: memref<128x576xbf16, #tpu.memory_space<vmem>>, %arg6: memref<1x576xf32, #tpu.memory_space<vmem>>, %arg7: memref<576x128xbf16, #tpu.memory_space<vmem>>, %arg8: memref<1x128xf32, #tpu.memory_space<vmem>>, %arg9: memref<256x128xbf16, #tpu.memory_space<vmem>>, %arg10: memref<1x128xf32, #tpu.memory_space<vmem>>, %arg11: memref<1x8x128xf32, #tpu.memory_space<vmem>>, %arg12: memref<1x8x128xf32, #tpu.memory_space<vmem>>, %arg13: memref<8x128xf32, #tpu.memory_space<vmem>>) attributes {dimension_semantics = [#tpu.dimension_semantics<parallel>, #tpu.dimension_semantics<arbitrary>], iteration_bounds = array<i64: 1, 4>, scalar_prefetch = 0 : i64, scratch_operands = 1 : i64, tpu.core_type = #tpu.core_type<tc>, window_params = [{transform_indices = @transform_0, window_bounds = array<i64: 8, 1>}, {transform_indices = @transform_1, window_bounds = array<i64: 8, 128>}, {transform_indices = @transform_2, window_bounds = array<i64: 1, 8, 256>}, {pipeline_mode = #tpu.pipeline_mode<synchronous>, transform_indices = @transform_3, window_bounds = array<i64: 128, 576>}, {pipeline_mode = #tpu.pipeline_mode<synchronous>, transform_indices = @transform_4, window_bounds = array<i64: 1, 576>}, {pipeline_mode = #tpu.pipeline_mode<synchronous>, transform_indices = @transform_5, window_bounds = array<i64: 576, 128>}, {pipeline_mode = #tpu.pipeline_mode<synchronous>, transform_indices = @transform_6, window_bounds = array<i64: 1, 128>}, {pipeline_mode = #tpu.pipeline_mode<synchronous>, transform_indices = @transform_7, window_bounds = array<i64: 256, 128>}, {pipeline_mode = #tpu.pipeline_mode<synchronous>, transform_indices = @transform_8, window_bounds = array<i64: 1, 128>}, {transform_indices = @transform_9, window_bounds = array<i64: 1, 8, 128>}, {transform_indices = @transform_10, window_bounds = array<i64: 1, 8, 128>}]} {
    %c0_i32 = arith.constant 0 : i32
    %0 = arith.cmpi eq, %arg1, %c0_i32 : i32
    %1 = arith.extui %0 : i1 to i32
    %c0_i32_0 = arith.constant 0 : i32
    %2 = arith.cmpi ne, %1, %c0_i32_0 : i32
    scf.if %2 {
      %c0_30 = arith.constant 0 : index
      %c0_31 = arith.constant 0 : index
      %45 = vector.load %arg3[%c0_30, %c0_31] : memref<8x128xf32, #tpu.memory_space<vmem>>, vector<8x128xf32>
      %c0_32 = arith.constant 0 : index
      %c0_33 = arith.constant 0 : index
      %46 = vector.load %arg13[%c0_32, %c0_33] : memref<8x128xf32, #tpu.memory_space<vmem>>, vector<8x128xf32>
      tpu.vector_store %arg13[%c0_32, %c0_33], %45 {strides = array<i32>} : memref<8x128xf32, #tpu.memory_space<vmem>>, vector<8x128xf32>,
    } else {
    }
    %c0 = arith.constant 0 : index
    %c0_1 = arith.constant 0 : index
    %3 = vector.load %arg13[%c0, %c0_1] : memref<8x128xf32, #tpu.memory_space<vmem>>, vector<8x128xf32>
    %c0_2 = arith.constant 0 : index
    %c0_3 = arith.constant 0 : index
    %4 = vector.load %arg2[%c0_2, %c0_3] : memref<8x1xi32, #tpu.memory_space<vmem>>, vector<8x1xi32>
    %5 = vector.broadcast %arg1 : i32 to vector<8x1xi32>
    %6 = arith.cmpi sgt, %4, %5 : vector<8x1xi32>
    %7 = arith.truncf %3 : vector<8x128xf32> to vector<8x128xbf16>
    %c0_4 = arith.constant 0 : index
    %c0_5 = arith.constant 0 : index
    %8 = vector.load %arg5[%c0_4, %c0_5] : memref<128x576xbf16, #tpu.memory_space<vmem>>, vector<128x576xbf16>
    %cst = arith.constant dense<0.000000e+00> : vector<8x576xf32>
    %9 = tpu.matmul %7, %8, %cst {dimension_numbers = #tpu.dot_dimension_numbers<[1], [0], [0], [1], [0, 0, 1, 1], [], []>} : vector<8x128xbf16>, vector<128x576xbf16>, vector<8x576xf32> -> vector<8x576xf32>
    %c0_6 = arith.constant 0 : index
    %c0_7 = arith.constant 0 : index
    %10 = vector.load %arg6[%c0_6, %c0_7] : memref<1x576xf32, #tpu.memory_space<vmem>>, vector<1x576xf32>
    %11 = vector.broadcast %10 : vector<1x576xf32> to vector<8x576xf32>
    %12 = arith.addf %9, %11 : vector<8x576xf32>
    %cst_8 = arith.constant 0.000000e+00 : f32
    %13 = vector.broadcast %cst_8 : f32 to vector<8x576xf32>
    %14 = arith.maximumf %12, %13 : vector<8x576xf32>
    %15 = arith.truncf %14 : vector<8x576xf32> to vector<8x576xbf16>
    %c0_9 = arith.constant 0 : index
    %c0_10 = arith.constant 0 : index
    %16 = vector.load %arg7[%c0_9, %c0_10] : memref<576x128xbf16, #tpu.memory_space<vmem>>, vector<576x128xbf16>
    %cst_11 = arith.constant dense<0.000000e+00> : vector<8x128xf32>
    %17 = tpu.matmul %15, %16, %cst_11 {dimension_numbers = #tpu.dot_dimension_numbers<[1], [0], [0], [1], [0, 0, 1, 1], [], []>} : vector<8x576xbf16>, vector<576x128xbf16>, vector<8x128xf32> -> vector<8x128xf32>
    %c0_12 = arith.constant 0 : index
    %c0_13 = arith.constant 0 : index
    %18 = vector.load %arg8[%c0_12, %c0_13] : memref<1x128xf32, #tpu.memory_space<vmem>>, vector<1x128xf32>
    %19 = vector.broadcast %18 : vector<1x128xf32> to vector<8x128xf32>
    %20 = arith.addf %17, %19 : vector<8x128xf32>
    %21 = vector.extract_strided_slice %12 {offsets = [0, 0], sizes = [8, 256], strides = [1, 1]} : vector<8x576xf32> to vector<8x256xf32>
    %22 = vector.extract_strided_slice %12 {offsets = [0, 256], sizes = [8, 256], strides = [1, 1]} : vector<8x576xf32> to vector<8x256xf32>
    %c0_14 = arith.constant 0 : index
    %c0_15 = arith.constant 0 : index
    %c0_16 = arith.constant 0 : index
    %23 = vector.load %arg4[%c0_14, %c0_15, %c0_16] : memref<1x8x256xbf16, #tpu.memory_space<vmem>>, vector<1x8x256xbf16>
    %24 = vector.shape_cast %23 : vector<1x8x256xbf16> to vector<8x256xbf16>
    %25 = arith.extf %24 : vector<8x256xbf16> to vector<8x256xf32>
    %26 = math.exp %22 : vector<8x256xf32>
    %27 = arith.mulf %26, %25 : vector<8x256xf32>
    %28 = arith.addf %21, %27 : vector<8x256xf32>
    %29 = arith.truncf %28 : vector<8x256xf32> to vector<8x256xbf16>
    %c0_17 = arith.constant 0 : index
    %c0_18 = arith.constant 0 : index
    %30 = vector.load %arg9[%c0_17, %c0_18] : memref<256x128xbf16, #tpu.memory_space<vmem>>, vector<256x128xbf16>
    %cst_19 = arith.constant dense<0.000000e+00> : vector<8x128xf32>
    %31 = tpu.matmul %29, %30, %cst_19 {dimension_numbers = #tpu.dot_dimension_numbers<[1], [0], [0], [1], [0, 0, 1, 1], [], []>} : vector<8x256xbf16>, vector<256x128xbf16>, vector<8x128xf32> -> vector<8x128xf32>
    %c0_20 = arith.constant 0 : index
    %c0_21 = arith.constant 0 : index
    %32 = vector.load %arg10[%c0_20, %c0_21] : memref<1x128xf32, #tpu.memory_space<vmem>>, vector<1x128xf32>
    %33 = vector.broadcast %32 : vector<1x128xf32> to vector<8x128xf32>
    %34 = arith.addf %31, %33 : vector<8x128xf32>
    %c0_22 = arith.constant 0 : index
    %c0_23 = arith.constant 0 : index
    %c0_24 = arith.constant 0 : index
    %35 = vector.load %arg11[%c0_22, %c0_23, %c0_24] : memref<1x8x128xf32, #tpu.memory_space<vmem>>, vector<1x8x128xf32>
    %36 = vector.shape_cast %35 : vector<1x8x128xf32> to vector<8x128xf32>
    %37 = vector.shape_cast %34 : vector<8x128xf32> to vector<1x8x128xf32>
    tpu.vector_store %arg11[%c0_22, %c0_23, %c0_24], %37 {strides = array<i32>} : memref<1x8x128xf32, #tpu.memory_space<vmem>>, vector<1x8x128xf32>,
    %c0_25 = arith.constant 0 : index
    %c0_26 = arith.constant 0 : index
    %c0_27 = arith.constant 0 : index
    %38 = vector.load %arg12[%c0_25, %c0_26, %c0_27] : memref<1x8x128xf32, #tpu.memory_space<vmem>>, vector<1x8x128xf32>
    %39 = vector.shape_cast %38 : vector<1x8x128xf32> to vector<8x128xf32>
    %40 = vector.shape_cast %20 : vector<8x128xf32> to vector<1x8x128xf32>
    tpu.vector_store %arg12[%c0_25, %c0_26, %c0_27], %40 {strides = array<i32>} : memref<1x8x128xf32, #tpu.memory_space<vmem>>, vector<1x8x128xf32>,
    %41 = vector.shape_cast %6 : vector<8x1xi1> to vector<8x1xi1>
    %42 = vector.broadcast %41 : vector<8x1xi1> to vector<8x128xi1>
    %43 = arith.select %42, %20, %3 : vector<8x128xi1>, vector<8x128xf32>
    %c0_28 = arith.constant 0 : index
    %c0_29 = arith.constant 0 : index
    %44 = vector.load %arg13[%c0_28, %c0_29] : memref<8x128xf32, #tpu.memory_space<vmem>>, vector<8x128xf32>
    tpu.vector_store %arg13[%c0_28, %c0_29], %43 {strides = array<i32>} : memref<8x128xf32, #tpu.memory_space<vmem>>, vector<8x128xf32>,
    return
  }
  func.func @transform_0(%arg0: i32, %arg1: i32) -> (i32, i32) {
    %c0_i32 = arith.constant 0 : i32
    %c0_i32_0 = arith.constant 0 : i32
    return %arg0, %c0_i32 : i32, i32
  }
  func.func @transform_1(%arg0: i32, %arg1: i32) -> (i32, i32) {
    %c0_i32 = arith.constant 0 : i32
    %c0_i32_0 = arith.constant 0 : i32
    return %arg0, %c0_i32 : i32, i32
  }
  func.func @transform_2(%arg0: i32, %arg1: i32) -> (i32, i32, i32) {
    %c0_i32 = arith.constant 0 : i32
    %c0_i32_0 = arith.constant 0 : i32
    return %arg1, %arg0, %c0_i32 : i32, i32, i32
  }
  func.func @transform_3(%arg0: i32, %arg1: i32) -> (i32, i32) {
    %c0_i32 = arith.constant 0 : i32
    %c0_i32_0 = arith.constant 0 : i32
    %c0_i32_1 = arith.constant 0 : i32
    return %c0_i32, %c0_i32_0 : i32, i32
  }
  func.func @transform_4(%arg0: i32, %arg1: i32) -> (i32, i32) {
    %c0_i32 = arith.constant 0 : i32
    %c0_i32_0 = arith.constant 0 : i32
    %c0_i32_1 = arith.constant 0 : i32
    return %c0_i32, %c0_i32_0 : i32, i32
  }
  func.func @transform_5(%arg0: i32, %arg1: i32) -> (i32, i32) {
    %c0_i32 = arith.constant 0 : i32
    %c0_i32_0 = arith.constant 0 : i32
    %c0_i32_1 = arith.constant 0 : i32
    return %c0_i32, %c0_i32_0 : i32, i32
  }
  func.func @transform_6(%arg0: i32, %arg1: i32) -> (i32, i32) {
    %c0_i32 = arith.constant 0 : i32
    %c0_i32_0 = arith.constant 0 : i32
    %c0_i32_1 = arith.constant 0 : i32
    return %c0_i32, %c0_i32_0 : i32, i32
  }
  func.func @transform_7(%arg0: i32, %arg1: i32) -> (i32, i32) {
    %c0_i32 = arith.constant 0 : i32
    %c0_i32_0 = arith.constant 0 : i32
    %c0_i32_1 = arith.constant 0 : i32
    return %c0_i32, %c0_i32_0 : i32, i32
  }
  func.func @transform_8(%arg0: i32, %arg1: i32) -> (i32, i32) {
    %c0_i32 = arith.constant 0 : i32
    %c0_i32_0 = arith.constant 0 : i32
    %c0_i32_1 = arith.constant 0 : i32
    return %c0_i32, %c0_i32_0 : i32, i32
  }
  func.func @transform_9(%arg0: i32, %arg1: i32) -> (i32, i32, i32) {
    %c0_i32 = arith.constant 0 : i32
    %c0_i32_0 = arith.constant 0 : i32
    return %arg1, %arg0, %c0_i32 : i32, i32, i32
  }
  func.func @transform_10(%arg0: i32, %arg1: i32) -> (i32, i32, i32) {
    %c0_i32 = arith.constant 0 : i32
    %c0_i32_0 = arith.constant 0 : i32
    return %arg1, %arg0, %c0_i32 : i32, i32, i32
  }
}

</mosaic_0001>

<llo_original>
// kernel: tpu_custom_call.1
$region0: #{tpu_custom_call.1}
  #allocation0 [shape = 'u32[]', space=smem, size = 0x4, offset = 0x4, fixed_abs, tag = 'smem constant byte address 0x4 - core index']
  #allocation1 [shape = 'u32[144,128]{1,0:T(1,128)}', space=vmem, size = 0x12000, scoped, tag = 'internal scratch']
  #allocation2 [shape = 'f32[8,128]{1,0:T(8,128)}', space=vmem, size = 0x1000, scoped, tag = 'scratch operand']
  %s0 = inlined_call_operand.vmem [shape: s32[8,1], index: 0, kind: input, shape index: {}]
  %s1 = inlined_call_operand.vmem [shape: f32[8,128], index: 1, kind: input, shape index: {}]
  %s2 = inlined_call_operand.vmem [shape: bf16[4,8,256], index: 2, kind: input, shape index: {}]
  %s3 = inlined_call_operand.vmem [shape: bf16[128,576], index: 3, kind: input, shape index: {}]
  %s4 = inlined_call_operand.vmem [shape: f32[1,576], index: 4, kind: input, shape index: {}]
  %s5 = inlined_call_operand.vmem [shape: bf16[576,128], index: 5, kind: input, shape index: {}]
  %s6 = inlined_call_operand.vmem [shape: f32[1,128], index: 6, kind: input, shape index: {}]
  %s7 = inlined_call_operand.vmem [shape: bf16[256,128], index: 7, kind: input, shape index: {}]
  %s8 = inlined_call_operand.vmem [shape: f32[1,128], index: 8, kind: input, shape index: {}]
  %s9 = inlined_call_operand.hbm [shape: f32[4,8,128], index: 9, kind: output, shape index: {0}]
  %s10 = inlined_call_operand.hbm [shape: f32[4,8,128], index: 10, kind: output, shape index: {1}]
  %11 = xla_tuple %s9, %s10
  %s12 = sld [smem:[#allocation0]]
  $region81: #{tpu_custom_call.1} parent=0
    _
  %s14 = ssub.s32 1, %s12
  %s15 = scalar_select 0, %s14, %s12
  $region1: #{tpu_custom_call.1} parent=0
    #allocation3 [shape = 'u8[8192]{0}', space=vmem, size = 0x2000, scoped, tag = 'output window, operand 0']
    #allocation4 [shape = 's32[2]{0}', space=sflag, size = 0x8, scoped, tag = 'scoped memory for tpu_custom_call.1']
    #allocation5 [shape = 'u8[8192]{0}', space=vmem, size = 0x2000, scoped, tag = 'output window, operand 1']
    #allocation6 [shape = 's32[2]{0}', space=sflag, size = 0x8, scoped, tag = 'scoped memory for tpu_custom_call.1']
    %16 = vsyncpa [#allocation4], 0
    %s17 = scalar_lea.sflag [#allocation4], 1
    %18 = vsyncpa %s17, 0
    %19 = vsyncpa [#allocation6], 0
    %s20 = scalar_lea.sflag [#allocation6], 1
    %21 = vsyncpa %s20, 0
    loop: start=0, step=1, limit=6
    $region2: #{tpu_custom_call.1} parent=1 // loop_pre_header
      _
    $region3: #{tpu_custom_call.1} parent=1 // loop_header
      %s23 = sphi 0, %s27
      %p24 = scmp.ge.s32.totalorder %s23, 6
      %s30 = sphi 0, %s42
      %s31 = sphi 0, %s38
      %s32 = sphi 0, %s30
      %s33 = sphi 0, %s31
      %s34 = sphi 0, %s32
      %s35 = sphi 0, %s33
      %s45 = sphi 0, %s47
      %s48 = sphi 0, %s45
      %s49 = sphi 0, %s48
      %s65 = sphi 0, %s49
      %s71 = sphi 0, %s73
      %s74 = sphi 0, %s71
      %s75 = sphi 0, %s74
      %s91 = sphi 0, %s75
      %s99 = sphi 0, %s101
      %s102 = sphi 0, %s99
      %s103 = sphi 0, %s102
      %s119 = sphi 0, %s103
      %s123 = sphi 0, %s123
      %s125 = sphi 0, %s123
      %s126 = sphi 0, %s125
      %s140 = sphi 0, %s126
      %s144 = sphi 0, %s144
      %s146 = sphi 0, %s144
      %s147 = sphi 0, %s146
      %s161 = sphi 0, %s147
      %s165 = sphi 0, %s165
      %s167 = sphi 0, %s165
      %s168 = sphi 0, %s167
      %s182 = sphi 0, %s168
      %s186 = sphi 0, %s186
      %s188 = sphi 0, %s186
      %s189 = sphi 0, %s188
      %s203 = sphi 0, %s189
      %s207 = sphi 0, %s207
      %s209 = sphi 0, %s207
      %s210 = sphi 0, %s209
      %s224 = sphi 0, %s210
      %s228 = sphi 0, %s228
      %s230 = sphi 0, %s228
      %s231 = sphi 0, %s230
      %s245 = sphi 0, %s231
      %s253 = sphi 0, %s255
      %s256 = sphi 0, %s253
      %s257 = sphi 0, %s256
      %s273 = sphi 0, %s257
      %s281 = sphi 0, %s283
      %s284 = sphi 0, %s281
      %s285 = sphi 0, %s284
      %s301 = sphi 0, %s285
    $region4: #{tpu_custom_call.1} parent=1 // loop_header_branch
      %26 = sbr.rel (%p24) target = $region8
    $region5: #{tpu_custom_call.1} parent=1 // loop_body
      %s28 = ssub.s32 %s23, 1
      %s29 = ssub.s32 %s23, 2
      %s36 = sadd.s32 1, %s31
      %p37 = scmp.ge.s32.totalorder %s36, 4
      %s38 = scalar_select %p37, 0, %s36
      %s39 = sadd.s32 1, %s30
      %s40 = scalar_select %p37, %s39, %s30
      %p41 = scmp.ge.s32.totalorder %s40, 1
      %s42 = scalar_select %p41, 0, %s40
      %s43 = ssub.s32 %s30, %s42
      %p44 = scmp.eq.s32.totalorder %s43, 0
      %s46 = sadd.s32 %s45, 1
      %s47 = scalar_select %p44, %s45, %s46
      %p50 = pneg %p44
      %p51 = scmp.eq.s32.totalorder %s23, 3
      %p52 = por %p50, %p51
      %p53 = scmp.ne.s32.totalorder %s45, %s48
      %p54 = scmp.eq.s32.totalorder %s23, 0
      %p55 = por %p53, %p54
      %p56 = scmp.ne.s32.totalorder %s45, %s48
      %p57 = scmp.eq.s32.totalorder %s28, 3
      %p58 = por %p56, %p57
      %p59 = scmp.ne.s32.totalorder %s48, %s49
      %p60 = scmp.eq.s32.totalorder %s28, 0
      %p61 = por %p59, %p60
      %p62 = scmp.ne.s32.totalorder %s48, %s49
      %p63 = scmp.eq.s32.totalorder %s29, 3
      %p64 = por %p62, %p63
      %p66 = scmp.ne.s32.totalorder %s49, %s65
      %p67 = scmp.eq.s32.totalorder %s29, 0
      %p68 = por %p66, %p67
      %s69 = ssub.s32 %s30, %s42
      %p70 = scmp.eq.s32.totalorder %s69, 0
      %s72 = sadd.s32 %s71, 1
      %s73 = scalar_select %p70, %s71, %s72
      %p76 = pneg %p70
      %p77 = scmp.eq.s32.totalorder %s23, 3
      %p78 = por %p76, %p77
      %p79 = scmp.ne.s32.totalorder %s71, %s74
      %p80 = scmp.eq.s32.totalorder %s23, 0
      %p81 = por %p79, %p80
      %p82 = scmp.ne.s32.totalorder %s71, %s74
      %p83 = scmp.eq.s32.totalorder %s28, 3
      %p84 = por %p82, %p83
      %p85 = scmp.ne.s32.totalorder %s74, %s75
      %p86 = scmp.eq.s32.totalorder %s28, 0
      %p87 = por %p85, %p86
      %p88 = scmp.ne.s32.totalorder %s74, %s75
      %p89 = scmp.eq.s32.totalorder %s29, 3
      %p90 = por %p88, %p89
      %p92 = scmp.ne.s32.totalorder %s75, %s91
      %p93 = scmp.eq.s32.totalorder %s29, 0
      %p94 = por %p92, %p93
      %s95 = ssub.s32 %s31, %s38
      %s96 = ssub.s32 %s30, %s42
      %s97 = sor.u32 %s95, %s96
      %p98 = scmp.eq.s32.totalorder %s97, 0
      %s100 = sadd.s32 %s99, 1
      %s101 = scalar_select %p98, %s99, %s100
      %p104 = pneg %p98
      %p105 = scmp.eq.s32.totalorder %s23, 3
      %p106 = por %p104, %p105
      %p107 = scmp.ne.s32.totalorder %s99, %s102
      %p108 = scmp.eq.s32.totalorder %s23, 0
      %p109 = por %p107, %p108
      %p110 = scmp.ne.s32.totalorder %s99, %s102
      %p111 = scmp.eq.s32.totalorder %s28, 3
      %p112 = por %p110, %p111
      %p113 = scmp.ne.s32.totalorder %s102, %s103
      %p114 = scmp.eq.s32.totalorder %s28, 0
      %p115 = por %p113, %p114
      %p116 = scmp.ne.s32.totalorder %s102, %s103
      %p117 = scmp.eq.s32.totalorder %s29, 3
      %p118 = por %p116, %p117
      %p120 = scmp.ne.s32.totalorder %s103, %s119
      %p121 = scmp.eq.s32.totalorder %s29, 0
      %p122 = por %p120, %p121
      %s124 = sadd.s32 %s123, 1
      %p127 = scmp.eq.s32.totalorder %s23, 3
      %p128 = scmp.ne.s32.totalorder %s123, %s125
      %p129 = scmp.eq.s32.totalorder %s23, 0
      %p130 = por %p128, %p129
      %p131 = scmp.ne.s32.totalorder %s123, %s125
      %p132 = scmp.eq.s32.totalorder %s28, 3
      %p133 = por %p131, %p132
      %p134 = scmp.ne.s32.totalorder %s125, %s126
      %p135 = scmp.eq.s32.totalorder %s28, 0
      %p136 = por %p134, %p135
      %p137 = scmp.ne.s32.totalorder %s125, %s126
      %p138 = scmp.eq.s32.totalorder %s29, 3
      %p139 = por %p137, %p138
      %p141 = scmp.ne.s32.totalorder %s126, %s140
      %p142 = scmp.eq.s32.totalorder %s29, 0
      %p143 = por %p141, %p142
      %s145 = sadd.s32 %s144, 1
      %p148 = scmp.eq.s32.totalorder %s23, 3
      %p149 = scmp.ne.s32.totalorder %s144, %s146
      %p150 = scmp.eq.s32.totalorder %s23, 0
      %p151 = por %p149, %p150
      %p152 = scmp.ne.s32.totalorder %s144, %s146
      %p153 = scmp.eq.s32.totalorder %s28, 3
      %p154 = por %p152, %p153
      %p155 = scmp.ne.s32.totalorder %s146, %s147
      %p156 = scmp.eq.s32.totalorder %s28, 0
      %p157 = por %p155, %p156
      %p158 = scmp.ne.s32.totalorder %s146, %s147
      %p159 = scmp.eq.s32.totalorder %s29, 3
      %p160 = por %p158, %p159
      %p162 = scmp.ne.s32.totalorder %s147, %s161
      %p163 = scmp.eq.s32.totalorder %s29, 0
      %p164 = por %p162, %p163
      %s166 = sadd.s32 %s165, 1
      %p169 = scmp.eq.s32.totalorder %s23, 3
      %p170 = scmp.ne.s32.totalorder %s165, %s167
      %p171 = scmp.eq.s32.totalorder %s23, 0
      %p172 = por %p170, %p171
      %p173 = scmp.ne.s32.totalorder %s165, %s167
      %p174 = scmp.eq.s32.totalorder %s28, 3
      %p175 = por %p173, %p174
      %p176 = scmp.ne.s32.totalorder %s167, %s168
      %p177 = scmp.eq.s32.totalorder %s28, 0
      %p178 = por %p176, %p177
      %p179 = scmp.ne.s32.totalorder %s167, %s168
      %p180 = scmp.eq.s32.totalorder %s29, 3
      %p181 = por %p179, %p180
      %p183 = scmp.ne.s32.totalorder %s168, %s182
      %p184 = scmp.eq.s32.totalorder %s29, 0
      %p185 = por %p183, %p184
      %s187 = sadd.s32 %s186, 1
      %p190 = scmp.eq.s32.totalorder %s23, 3
      %p191 = scmp.ne.s32.totalorder %s186, %s188
      %p192 = scmp.eq.s32.totalorder %s23, 0
      %p193 = por %p191, %p192
      %p194 = scmp.ne.s32.totalorder %s186, %s188
      %p195 = scmp.eq.s32.totalorder %s28, 3
      %p196 = por %p194, %p195
      %p197 = scmp.ne.s32.totalorder %s188, %s189
      %p198 = scmp.eq.s32.totalorder %s28, 0
      %p199 = por %p197, %p198
      %p200 = scmp.ne.s32.totalorder %s188, %s189
      %p201 = scmp.eq.s32.totalorder %s29, 3
      %p202 = por %p200, %p201
      %p204 = scmp.ne.s32.totalorder %s189, %s203
      %p205 = scmp.eq.s32.totalorder %s29, 0
      %p206 = por %p204, %p205
      %s208 = sadd.s32 %s207, 1
      %p211 = scmp.eq.s32.totalorder %s23, 3
      %p212 = scmp.ne.s32.totalorder %s207, %s209
      %p213 = scmp.eq.s32.totalorder %s23, 0
      %p214 = por %p212, %p213
      %p215 = scmp.ne.s32.totalorder %s207, %s209
      %p216 = scmp.eq.s32.totalorder %s28, 3
      %p217 = por %p215, %p216
      %p218 = scmp.ne.s32.totalorder %s209, %s210
      %p219 = scmp.eq.s32.totalorder %s28, 0
      %p220 = por %p218, %p219
      %p221 = scmp.ne.s32.totalorder %s209, %s210
      %p222 = scmp.eq.s32.totalorder %s29, 3
      %p223 = por %p221, %p222
      %p225 = scmp.ne.s32.totalorder %s210, %s224
      %p226 = scmp.eq.s32.totalorder %s29, 0
      %p227 = por %p225, %p226
      %s229 = sadd.s32 %s228, 1
      %p232 = scmp.eq.s32.totalorder %s23, 3
      %p233 = scmp.ne.s32.totalorder %s228, %s230
      %p234 = scmp.eq.s32.totalorder %s23, 0
      %p235 = por %p233, %p234
      %p236 = scmp.ne.s32.totalorder %s228, %s230
      %p237 = scmp.eq.s32.totalorder %s28, 3
      %p238 = por %p236, %p237
      %p239 = scmp.ne.s32.totalorder %s230, %s231
      %p240 = scmp.eq.s32.totalorder %s28, 0
      %p241 = por %p239, %p240
      %p242 = scmp.ne.s32.totalorder %s230, %s231
      %p243 = scmp.eq.s32.totalorder %s29, 3
      %p244 = por %p242, %p243
      %p246 = scmp.ne.s32.totalorder %s231, %s245
      %p247 = scmp.eq.s32.totalorder %s29, 0
      %p248 = por %p246, %p247
      %s249 = ssub.s32 %s31, %s38
      %s250 = ssub.s32 %s30, %s42
      %s251 = sor.u32 %s249, %s250
      %p252 = scmp.eq.s32.totalorder %s251, 0
      %s254 = sadd.s32 %s253, 1
      %s255 = scalar_select %p252, %s253, %s254
      %p258 = pneg %p252
      %p259 = scmp.eq.s32.totalorder %s23, 3
      %p260 = por %p258, %p259
      %p261 = scmp.ne.s32.totalorder %s253, %s256
      %p262 = scmp.eq.s32.totalorder %s23, 0
      %p263 = por %p261, %p262
      %p264 = scmp.ne.s32.totalorder %s253, %s256
      %p265 = scmp.eq.s32.totalorder %s28, 3
      %p266 = por %p264, %p265
      %p267 = scmp.ne.s32.totalorder %s256, %s257
      %p268 = scmp.eq.s32.totalorder %s28, 0
      %p269 = por %p267, %p268
      %p270 = scmp.ne.s32.totalorder %s256, %s257
      %p271 = scmp.eq.s32.totalorder %s29, 3
      %p272 = por %p270, %p271
      %p274 = scmp.ne.s32.totalorder %s257, %s273
      %p275 = scmp.eq.s32.totalorder %s29, 0
      %p276 = por %p274, %p275
      %s277 = ssub.s32 %s31, %s38
      %s278 = ssub.s32 %s30, %s42
      %s279 = sor.u32 %s277, %s278
      %p280 = scmp.eq.s32.totalorder %s279, 0
      %s282 = sadd.s32 %s281, 1
      %s283 = scalar_select %p280, %s281, %s282
      %p286 = pneg %p280
      %p287 = scmp.eq.s32.totalorder %s23, 3
      %p288 = por %p286, %p287
      %p289 = scmp.ne.s32.totalorder %s281, %s284
      %p290 = scmp.eq.s32.totalorder %s23, 0
      %p291 = por %p289, %p290
      %p292 = scmp.ne.s32.totalorder %s281, %s284
      %p293 = scmp.eq.s32.totalorder %s28, 3
      %p294 = por %p292, %p293
      %p295 = scmp.ne.s32.totalorder %s284, %s285
      %p296 = scmp.eq.s32.totalorder %s28, 0
      %p297 = por %p295, %p296
      %p298 = scmp.ne.s32.totalorder %s284, %s285
      %p299 = scmp.eq.s32.totalorder %s29, 3
      %p300 = por %p298, %p299
      %p302 = scmp.ne.s32.totalorder %s285, %s301
      %p303 = scmp.eq.s32.totalorder %s29, 0
      %p304 = por %p302, %p303
      %p305 = scmp.le.s32.totalorder 1, %s23
      %p306 = scmp.lt.s32.totalorder %s23, 5
      %p307 = pnand %p305, %p306
      %p308 = pneg %p307
      // Predicated region
      $region9: #{tpu_custom_call.1} parent=5 // pred_check
        _
      $region10: #{tpu_custom_call.1} parent=5 // pred_check_branch
        %310 = sbr.rel (%p307) target = $region12
      $region11: #{tpu_custom_call.1} parent=5 // pred_region
        %s311 = ssub.s32 %s23, 1
        // Predicated region
        $region13: #{tpu_custom_call.1} parent=11 // pred_check
          %p312 = pneg %p61
        $region14: #{tpu_custom_call.1} parent=11 // pred_check_branch
          %314 = sbr.rel (%p312) target = $region16
        $region15: #{tpu_custom_call.1} parent=11 // pred_region
          %p315 = scmp.lt.s32.totalorder %s32, 0
          %s316 = scalar_select %p315, %s32, 0
          %s317 = smul.addr %s316, 8
          %s318 = scalar_lea.vmem %s0, %s317
        $region16: #{tpu_custom_call.1} parent=11 // pred_fallthru
          _
        // Predicated region
        $region17: #{tpu_custom_call.1} parent=11 // pred_check
          %p319 = pneg %p87
        $region18: #{tpu_custom_call.1} parent=11 // pred_check_branch
          %321 = sbr.rel (%p319) target = $region20
        $region19: #{tpu_custom_call.1} parent=11 // pred_region
          %p322 = scmp.lt.s32.totalorder %s32, 0
          %s323 = scalar_select %p322, %s32, 0
          %s324 = smul.addr %s323, 8
          %s325 = scalar_lea.vmem %s1, %s324
        $region20: #{tpu_custom_call.1} parent=11 // pred_fallthru
          _
        // Predicated region
        $region21: #{tpu_custom_call.1} parent=11 // pred_check
          %p326 = pneg %p136
        $region22: #{tpu_custom_call.1} parent=11 // pred_check_branch
          %328 = sbr.rel (%p326) target = $region24
        $region23: #{tpu_custom_call.1} parent=11 // pred_region
          _
        $region24: #{tpu_custom_call.1} parent=11 // pred_fallthru
          _
        // Predicated region
        $region25: #{tpu_custom_call.1} parent=11 // pred_check
          %p329 = pneg %p157
        $region26: #{tpu_custom_call.1} parent=11 // pred_check_branch
          %331 = sbr.rel (%p329) target = $region28
        $region27: #{tpu_custom_call.1} parent=11 // pred_region
          _
        $region28: #{tpu_custom_call.1} parent=11 // pred_fallthru
          _
        // Predicated region
        $region29: #{tpu_custom_call.1} parent=11 // pred_check
          %p332 = pneg %p178
        $region30: #{tpu_custom_call.1} parent=11 // pred_check_branch
          %334 = sbr.rel (%p332) target = $region32
        $region31: #{tpu_custom_call.1} parent=11 // pred_region
          _
        $region32: #{tpu_custom_call.1} parent=11 // pred_fallthru
          _
        // Predicated region
        $region33: #{tpu_custom_call.1} parent=11 // pred_check
          %p335 = pneg %p199
        $region34: #{tpu_custom_call.1} parent=11 // pred_check_branch
          %337 = sbr.rel (%p335) target = $region36
        $region35: #{tpu_custom_call.1} parent=11 // pred_region
          _
        $region36: #{tpu_custom_call.1} parent=11 // pred_fallthru
          _
        // Predicated region
        $region37: #{tpu_custom_call.1} parent=11 // pred_check
          %p338 = pneg %p220
        $region38: #{tpu_custom_call.1} parent=11 // pred_check_branch
          %340 = sbr.rel (%p338) target = $region40
        $region39: #{tpu_custom_call.1} parent=11 // pred_region
          _
        $region40: #{tpu_custom_call.1} parent=11 // pred_fallthru
          _
        // Predicated region
        $region41: #{tpu_custom_call.1} parent=11 // pred_check
          %p341 = pneg %p241
        $region42: #{tpu_custom_call.1} parent=11 // pred_check_branch
          %343 = sbr.rel (%p341) target = $region44
        $region43: #{tpu_custom_call.1} parent=11 // pred_region
          _
        $region44: #{tpu_custom_call.1} parent=11 // pred_fallthru
          _
      $region12: #{tpu_custom_call.1} parent=5 // pred_fallthru
        _
      %p344 = scmp.lt.s32.totalorder %s23, 4
      // Predicated region
      $region45: #{tpu_custom_call.1} parent=5 // pred_check
        %p345 = pneg %p344
      $region46: #{tpu_custom_call.1} parent=5 // pred_check_branch
        %347 = sbr.rel (%p345) target = $region48
      $region47: #{tpu_custom_call.1} parent=5 // pred_region
        // Predicated region
        $region49: #{tpu_custom_call.1} parent=47 // pred_check
          %p348 = pneg %p109
        $region50: #{tpu_custom_call.1} parent=47 // pred_check_branch
          %350 = sbr.rel (%p348) target = $region52
        $region51: #{tpu_custom_call.1} parent=47 // pred_region
          %p351 = scmp.lt.s32.totalorder %s31, 3
          %s352 = scalar_select %p351, %s31, 3
          %p353 = scmp.lt.s32.totalorder %s30, 0
          %s354 = scalar_select %p353, %s30, 0
          %s355 = smul.addr %s354, 2
          %s356 = smul.addr %s352, 2
          %s357 = sadd.s32 %s355, %s356
          %s358 = smul.addr %s357, 4
          %s359 = scalar_lea.vmem %s2, %s358
        $region52: #{tpu_custom_call.1} parent=47 // pred_fallthru
          _
      $region48: #{tpu_custom_call.1} parent=5 // pred_fallthru
        _
      %p360 = scmp.le.s32.totalorder 1, %s23
      %p361 = scmp.lt.s32.totalorder %s23, 5
      %p362 = pnand %p360, %p361
      %p363 = pneg %p362
      // Predicated region
      $region53: #{tpu_custom_call.1} parent=5 // pred_check
        _
      $region54: #{tpu_custom_call.1} parent=5 // pred_check_branch
        %365 = sbr.rel (%p362) target = $region56
      $region55: #{tpu_custom_call.1} parent=5 // pred_region
        %s366 = ssub.s32 %s23, 1
        %p367 = scmp.lt.s32.totalorder %s32, 0
        %s368 = scalar_select %p367, %s32, 0
        %s369 = smul.addr %s368, 8
        %s370 = scalar_lea.vmem %s0, %s369
        %p371 = pneg %p61
        %p372 = pneg %p58
        %p373 = scmp.lt.s32.totalorder %s32, 0
        %s374 = scalar_select %p373, %s32, 0
        %s375 = smul.addr %s374, 8
        %s376 = scalar_lea.vmem %s1, %s375
        %p377 = pneg %p87
        %p378 = pneg %p84
        %p379 = scmp.lt.s32.totalorder %s33, 3
        %s380 = scalar_select %p379, %s33, 3
        %p381 = scmp.lt.s32.totalorder %s32, 0
        %s382 = scalar_select %p381, %s32, 0
        %s383 = smul.addr %s382, 2
        %s384 = smul.addr %s380, 2
        %s385 = sadd.s32 %s383, %s384
        %s386 = smul.addr %s385, 4
        %s387 = scalar_lea.vmem %s2, %s386
        %p388 = pneg %p115
        %p389 = pneg %p112
        %p390 = pneg %p136
        %p391 = pneg %p133
        %p392 = pneg %p157
        %p393 = pneg %p154
        %p394 = pneg %p178
        %p395 = pneg %p175
        %p396 = pneg %p199
        %p397 = pneg %p196
        %p398 = pneg %p220
        %p399 = pneg %p217
        %p400 = pneg %p241
        %p401 = pneg %p238
        %p402 = pneg %p269
        %p403 = pneg %p266
        %s404 = sand.u32 %s256, 1
        %s405 = scalar_lea.sflag [#allocation4], %s404
        %s406 = sand.u32 %s256, 1
        %s407 = smul.addr %s406, 8
        %s408 = scalar_lea.vmem [#allocation3], %s407
        %p409 = pneg %p297
        %p410 = pneg %p294
        %s411 = sand.u32 %s284, 1
        %s412 = scalar_lea.sflag [#allocation6], %s411
        %s413 = sand.u32 %s284, 1
        %s414 = smul.addr %s413, 8
        %s415 = scalar_lea.vmem [#allocation5], %s414
        %p416 = scmp.lt.s32.totalorder %s32, 0
        %s417 = scalar_select %p416, %s32, 0
        %s418 = smul.addr %s417, 8
        %s419 = scalar_lea.vmem %s0, %s418
        %p420 = scmp.lt.s32.totalorder %s32, 0
        %s421 = scalar_select %p420, %s32, 0
        %s422 = smul.addr %s421, 8
        %s423 = scalar_lea.vmem %s1, %s422
        %p424 = scmp.lt.s32.totalorder %s33, 3
        %s425 = scalar_select %p424, %s33, 3
        %p426 = scmp.lt.s32.totalorder %s32, 0
        %s427 = scalar_select %p426, %s32, 0
        %s428 = smul.addr %s427, 2
        %s429 = smul.addr %s425, 2
        %s430 = sadd.s32 %s428, %s429
        %s431 = smul.addr %s430, 4
        %s432 = scalar_lea.vmem %s2, %s431
        %p434 = scmp.eq.s32.totalorder %s33, 0
        // Predicated region
        $region57: #{tpu_custom_call.1} parent=55 // pred_check
          %p435 = pneg %p434
        $region58: #{tpu_custom_call.1} parent=55 // pred_check_branch
          %437 = sbr.rel (%p435) target = $region60
        $region59: #{tpu_custom_call.1} parent=55 // pred_region
          %v438 = vld [vmem:[%s423] sm:$0xff]
          %439 = vst [vmem:[#allocation2] sm:$0xff] %v438
        $region60: #{tpu_custom_call.1} parent=55 // pred_fallthru
          _
        %v440 = vld [vmem:[#allocation2] sm:$0xff]
        %v441 = vld [vmem:[%s419] sm:$0xff]
        %v442 = vstv %s33
        %vm443 = vcmp.gt.s32.totalorder %v441, %v442
        %v444 = vpack.c.bf16 %v440, %v440
        %v445 = vld [vmem:[%s3] sm:$0xff]
        %v446 = vld [vmem:[%s3 + $0x8] sm:$0xff]
        %v447 = vld [vmem:[%s3 + $0x10] sm:$0xf]
        %v448 = vld [vmem:[%s3 + $0x14] sm:$0xff]
        %v449 = vld [vmem:[%s3 + $0x1c] sm:$0xff]
        %v450 = vld [vmem:[%s3 + $0x24] sm:$0xf]
        %v451 = vld [vmem:[%s3 + $0x28] sm:$0xff]
        %v452 = vld [vmem:[%s3 + $0x30] sm:$0xff]
        %v453 = vld [vmem:[%s3 + $0x38] sm:$0xf]
        %v454 = vld [vmem:[%s3 + $0x3c] sm:$0xff]
        %v455 = vld [vmem:[%s3 + $0x44] sm:$0xff]
        %v456 = vld [vmem:[%s3 + $0x4c] sm:$0xf]
        %v457 = vld [vmem:[%s3 + $0x50] sm:$0xff]
        %v458 = vld [vmem:[%s3 + $0x58] sm:$0xff]
        %v459 = vld [vmem:[%s3 + $0x60] sm:$0xf]
        %v460 = vld [vmem:[%s3 + $0x64] sm:$0xff]
        %v461 = vld [vmem:[%s3 + $0x6c] sm:$0xff]
        %v462 = vld [vmem:[%s3 + $0x74] sm:$0xf]
        %v463 = vld [vmem:[%s3 + $0x78] sm:$0xff]
        %v464 = vld [vmem:[%s3 + $0x80] sm:$0xff]
        %v465 = vld [vmem:[%s3 + $0x88] sm:$0xf]
        %v466 = vld [vmem:[%s3 + $0x8c] sm:$0xff]
        %v467 = vld [vmem:[%s3 + $0x94] sm:$0xff]
        %v468 = vld [vmem:[%s3 + $0x9c] sm:$0xf]
        %v469 = vld [vmem:[%s3 + $0xa0] sm:$0xff]
        %v470 = vld [vmem:[%s3 + $0xa8] sm:$0xff]
        %v471 = vld [vmem:[%s3 + $0xb0] sm:$0xf]
        %v472 = vld [vmem:[%s3 + $0xb4] sm:$0xff]
        %v473 = vld [vmem:[%s3 + $0xbc] sm:$0xff]
        %v474 = vld [vmem:[%s3 + $0xc4] sm:$0xf]
        %v475 = vld [vmem:[%s3 + $0xc8] sm:$0xff]
        %v476 = vld [vmem:[%s3 + $0xd0] sm:$0xff]
        %v477 = vld [vmem:[%s3 + $0xd8] sm:$0xf]
        %v478 = vld [vmem:[%s3 + $0xdc] sm:$0xff]
        %v479 = vld [vmem:[%s3 + $0xe4] sm:$0xff]
        %v480 = vld [vmem:[%s3 + $0xec] sm:$0xf]
        %v481 = vld [vmem:[%s3 + $0xf0] sm:$0xff]
        %v482 = vld [vmem:[%s3 + $0xf8] sm:$0xff]
        %v483 = vld [vmem:[%s3 + $0x100] sm:$0xf]
        %v484 = vld [vmem:[%s3 + $0x104] sm:$0xff]
        %v485 = vld [vmem:[%s3 + $0x10c] sm:$0xff]
        %v486 = vld [vmem:[%s3 + $0x114] sm:$0xf]
        %v487 = vld [vmem:[%s3 + $0x118] sm:$0xff]
        %v488 = vld [vmem:[%s3 + $0x120] sm:$0xff]
        %v489 = vld [vmem:[%s3 + $0x128] sm:$0xf]
        %v490 = vld [vmem:[%s3 + $0x12c] sm:$0xff]
        %v491 = vld [vmem:[%s3 + $0x134] sm:$0xff]
        %v492 = vld [vmem:[%s3 + $0x13c] sm:$0xf]
        %v493 = vld [vmem:[%s4] sm:$0x1f]
        %v495 = vlaneseq
        %v496 = vshrl.u32 %v495, 7
        %v497 = vsub.s32 0, %v496
        %v498 = vrot.slane %v493, %v497
        %v499 = vlaneseq
        %v500 = vshrl.u32 %v499, 7
        %v501 = vsub.s32 1, %v500
        %v502 = vrot.slane %v493, %v501
        %v503 = vlaneseq
        %v504 = vshrl.u32 %v503, 7
        %v505 = vsub.s32 2, %v504
        %v506 = vrot.slane %v493, %v505
        %v507 = vlaneseq
        %v508 = vshrl.u32 %v507, 7
        %v509 = vsub.s32 3, %v508
        %v510 = vrot.slane %v493, %v509
        %v511 = vlaneseq
        %v512 = vshrl.u32 %v511, 7
        %v513 = vsub.s32 4, %v512
        %v514 = vrot.slane %v493, %v513
        %v568 = vunpack.c.l.b16 %v445
        %v569 = vunpack.c.h.b16 %v445
        %v570 = vunpack.c.l.b16 %v446
        %v571 = vunpack.c.h.b16 %v446
        %v572 = vunpack.c.l.b16 %v447
        %v573 = vunpack.c.l.b16 %v448
        %v574 = vunpack.c.h.b16 %v448
        %v575 = vunpack.c.l.b16 %v449
        %v576 = vunpack.c.h.b16 %v449
        %v577 = vunpack.c.l.b16 %v450
        %v578 = vunpack.c.l.b16 %v451
        %v579 = vunpack.c.h.b16 %v451
        %v580 = vunpack.c.l.b16 %v452
        %v581 = vunpack.c.h.b16 %v452
        %v582 = vunpack.c.l.b16 %v453
        %v583 = vunpack.c.l.b16 %v454
        %v584 = vunpack.c.h.b16 %v454
        %v585 = vunpack.c.l.b16 %v455
        %v586 = vunpack.c.h.b16 %v455
        %v587 = vunpack.c.l.b16 %v456
        %v588 = vunpack.c.l.b16 %v457
        %v589 = vunpack.c.h.b16 %v457
        %v590 = vunpack.c.l.b16 %v458
        %v591 = vunpack.c.h.b16 %v458
        %v592 = vunpack.c.l.b16 %v459
        %v593 = vunpack.c.l.b16 %v460
        %v594 = vunpack.c.h.b16 %v460
        %v595 = vunpack.c.l.b16 %v461
        %v596 = vunpack.c.h.b16 %v461
        %v597 = vunpack.c.l.b16 %v462
        %v598 = vunpack.c.l.b16 %v463
        %v599 = vunpack.c.h.b16 %v463
        %v600 = vunpack.c.l.b16 %v464
        %v601 = vunpack.c.h.b16 %v464
        %v602 = vunpack.c.l.b16 %v465
        %v603 = vunpack.c.l.b16 %v466
        %v604 = vunpack.c.h.b16 %v466
        %v605 = vunpack.c.l.b16 %v467
        %v606 = vunpack.c.h.b16 %v467
        %v607 = vunpack.c.l.b16 %v468
        %v608 = vunpack.c.l.b16 %v469
        %v609 = vunpack.c.h.b16 %v469
        %v610 = vunpack.c.l.b16 %v470
        %v611 = vunpack.c.h.b16 %v470
        %v612 = vunpack.c.l.b16 %v471
        %v613 = vunpack.c.l.b16 %v472
        %v614 = vunpack.c.h.b16 %v472
        %v615 = vunpack.c.l.b16 %v473
        %v616 = vunpack.c.h.b16 %v473
        %v617 = vunpack.c.l.b16 %v474
        %v618 = vunpack.c.l.b16 %v475
        %v619 = vunpack.c.h.b16 %v475
        %v620 = vunpack.c.l.b16 %v476
        %v621 = vunpack.c.h.b16 %v476
        %v622 = vunpack.c.l.b16 %v477
        %v623 = vunpack.c.l.b16 %v478
        %v624 = vunpack.c.h.b16 %v478
        %v625 = vunpack.c.l.b16 %v479
        %v626 = vunpack.c.h.b16 %v479
        %v627 = vunpack.c.l.b16 %v480
        %v628 = vunpack.c.l.b16 %v481
        %v629 = vunpack.c.h.b16 %v481
        %v630 = vunpack.c.l.b16 %v482
        %v631 = vunpack.c.h.b16 %v482
        %v632 = vunpack.c.l.b16 %v483
        %v633 = vunpack.c.l.b16 %v484
        %v634 = vunpack.c.h.b16 %v484
        %v635 = vunpack.c.l.b16 %v485
        %v636 = vunpack.c.h.b16 %v485
        %v637 = vunpack.c.l.b16 %v486
        %v638 = vunpack.c.l.b16 %v487
        %v639 = vunpack.c.h.b16 %v487
        %v640 = vunpack.c.l.b16 %v488
        %v641 = vunpack.c.h.b16 %v488
        %v642 = vunpack.c.l.b16 %v489
        %v643 = vunpack.c.l.b16 %v490
        %v644 = vunpack.c.h.b16 %v490
        %v645 = vunpack.c.l.b16 %v491
        %v646 = vunpack.c.h.b16 %v491
        %v647 = vunpack.c.l.b16 %v492
        %v648 = vpack.c.b16 %v573, %v568
        %v649 = vpack.c.b16 %v574, %v569
        %v650 = vpack.c.b16 %v575, %v570
        %v651 = vpack.c.b16 %v576, %v571
        %v652 = vpack.c.b16 %v577, %v572
        %v653 = vpack.c.b16 %v583, %v578
        %v654 = vpack.c.b16 %v584, %v579
        %v655 = vpack.c.b16 %v585, %v580
        %v656 = vpack.c.b16 %v586, %v581
        %v657 = vpack.c.b16 %v587, %v582
        %v658 = vpack.c.b16 %v593, %v588
        %v659 = vpack.c.b16 %v594, %v589
        %v660 = vpack.c.b16 %v595, %v590
        %v661 = vpack.c.b16 %v596, %v591
        %v662 = vpack.c.b16 %v597, %v592
        %v663 = vpack.c.b16 %v603, %v598
        %v664 = vpack.c.b16 %v604, %v599
        %v665 = vpack.c.b16 %v605, %v600
        %v666 = vpack.c.b16 %v606, %v601
        %v667 = vpack.c.b16 %v607, %v602
        %v668 = vpack.c.b16 %v613, %v608
        %v669 = vpack.c.b16 %v614, %v609
        %v670 = vpack.c.b16 %v615, %v610
        %v671 = vpack.c.b16 %v616, %v611
        %v672 = vpack.c.b16 %v617, %v612
        %v673 = vpack.c.b16 %v623, %v618
        %v674 = vpack.c.b16 %v624, %v619
        %v675 = vpack.c.b16 %v625, %v620
        %v676 = vpack.c.b16 %v626, %v621
        %v677 = vpack.c.b16 %v627, %v622
        %v678 = vpack.c.b16 %v633, %v628
        %v679 = vpack.c.b16 %v634, %v629
        %v680 = vpack.c.b16 %v635, %v630
        %v681 = vpack.c.b16 %v636, %v631
        %v682 = vpack.c.b16 %v637, %v632
        %v683 = vpack.c.b16 %v643, %v638
        %v684 = vpack.c.b16 %v644, %v639
        %v685 = vpack.c.b16 %v645, %v640
        %v686 = vpack.c.b16 %v646, %v641
        %v687 = vpack.c.b16 %v647, %v642
        %728 = vmatprep.subr.bf16.mxu0 %v649
        %729 = vmatpush1.bf16.msra.mxu0 %v648
        %730 = vmatprep.subr.bf16.mxu0 %v654
        %731 = vmatpush1.bf16.msra.mxu0 %v653
        %732 = vmatprep.subr.bf16.mxu0 %v659
        %733 = vmatpush1.bf16.msra.mxu0 %v658
        %734 = vmatprep.subr.bf16.mxu0 %v664
        %735 = vmatpush1.bf16.msra.mxu0 %v663
        %736 = vmatprep.subr.bf16.mxu0 %v669
        %737 = vmatpush1.bf16.msra.mxu0 %v668
        %738 = vmatprep.subr.bf16.mxu0 %v674
        %739 = vmatpush1.bf16.msra.mxu0 %v673
        %740 = vmatprep.subr.bf16.mxu0 %v679
        %741 = vmatpush1.bf16.msra.mxu0 %v678
        %742 = vmatprep.subr.bf16.mxu0 %v684
        %743 = vmatpush1.bf16.msra.mxu0 %v683
        %744 = vmatprep.subr.bf16.mxu0 0
        %745 = vmatpush1.bf16.msra.mxu0 0
        %746 = vmatprep.subr.bf16.mxu0 0
        %747 = vmatpush1.bf16.msra.mxu0 0
        %748 = vmatprep.subr.bf16.mxu0 0
        %749 = vmatpush1.bf16.msra.mxu0 0
        %750 = vmatprep.subr.bf16.mxu0 0
        %751 = vmatpush1.bf16.msra.mxu0 0
        %752 = vmatprep.subr.bf16.mxu0 0
        %753 = vmatpush1.bf16.msra.mxu0 0
        %754 = vmatprep.subr.bf16.mxu0 0
        %755 = vmatpush1.bf16.msra.mxu0 0
        %756 = vmatprep.subr.bf16.mxu0 0
        %757 = vmatpush1.bf16.msra.mxu0 0
        %758 = vmatprep.subr.bf16.mxu0 0
        %759 = vmatpush1.bf16.msra.mxu0 0
        %760 = vmatprep.mubr.bf16.mxu0 0
        %761 = vmatmul.mubr.bf16.gmra.mrb[0].mxu0 %v444
        %v762 = vpop.f32.mrb[0].mxu0
        %v763 = vadd.f32 %v498, %v762
        %v764 = vpop.f32.mrb[0].mxu0
        %v765 = vadd.f32 %v502, %v764
        %v766 = vpop.f32.mrb[0].mxu0
        %v767 = vpop.f32.mrb[0].mxu0
        %768 = vdwg.mxu0
        %769 = vmatprep.subr.bf16.mxu0 %v651
        %770 = vmatpush1.bf16.msra.mxu0 %v650
        %771 = vmatprep.subr.bf16.mxu0 %v656
        %772 = vmatpush1.bf16.msra.mxu0 %v655
        %773 = vmatprep.subr.bf16.mxu0 %v661
        %774 = vmatpush1.bf16.msra.mxu0 %v660
        %775 = vmatprep.subr.bf16.mxu0 %v666
        %776 = vmatpush1.bf16.msra.mxu0 %v665
        %777 = vmatprep.subr.bf16.mxu0 %v671
        %778 = vmatpush1.bf16.msra.mxu0 %v670
        %779 = vmatprep.subr.bf16.mxu0 %v676
        %780 = vmatpush1.bf16.msra.mxu0 %v675
        %781 = vmatprep.subr.bf16.mxu0 %v681
        %782 = vmatpush1.bf16.msra.mxu0 %v680
        %783 = vmatprep.subr.bf16.mxu0 %v686
        %784 = vmatpush1.bf16.msra.mxu0 %v685
        %785 = vmatprep.subr.bf16.mxu0 0
        %786 = vmatpush1.bf16.msra.mxu0 0
        %787 = vmatprep.subr.bf16.mxu0 0
        %788 = vmatpush1.bf16.msra.mxu0 0
        %789 = vmatprep.subr.bf16.mxu0 0
        %790 = vmatpush1.bf16.msra.mxu0 0
        %791 = vmatprep.subr.bf16.mxu0 0
        %792 = vmatpush1.bf16.msra.mxu0 0
        %793 = vmatprep.subr.bf16.mxu0 0
        %794 = vmatpush1.bf16.msra.mxu0 0
        %795 = vmatprep.subr.bf16.mxu0 0
        %796 = vmatpush1.bf16.msra.mxu0 0
        %797 = vmatprep.subr.bf16.mxu0 0
        %798 = vmatpush1.bf16.msra.mxu0 0
        %799 = vmatprep.subr.bf16.mxu0 0
        %800 = vmatpush1.bf16.msra.mxu0 0
        %801 = vmatprep.mubr.bf16.mxu0 0
        %802 = vmatmul.mubr.bf16.gmra.mrb[0].mxu0 %v444
        %v803 = vpop.f32.mrb[0].mxu0
        %v804 = vadd.f32 %v506, %v803
        %v805 = vpop.f32.mrb[0].mxu0
        %v806 = vadd.f32 %v510, %v805
        %v807 = vpop.f32.mrb[0].mxu0
        %v808 = vpop.f32.mrb[0].mxu0
        %809 = vdwg.mxu0
        %810 = vmatprep.subr.bf16.mxu0 0
        %811 = vmatpush1.bf16.msra.mxu0 %v652
        %812 = vmatprep.subr.bf16.mxu0 0
        %813 = vmatpush1.bf16.msra.mxu0 %v657
        %814 = vmatprep.subr.bf16.mxu0 0
        %815 = vmatpush1.bf16.msra.mxu0 %v662
        %816 = vmatprep.subr.bf16.mxu0 0
        %817 = vmatpush1.bf16.msra.mxu0 %v667
        %818 = vmatprep.subr.bf16.mxu0 0
        %819 = vmatpush1.bf16.msra.mxu0 %v672
        %820 = vmatprep.subr.bf16.mxu0 0
        %821 = vmatpush1.bf16.msra.mxu0 %v677
        %822 = vmatprep.subr.bf16.mxu0 0
        %823 = vmatpush1.bf16.msra.mxu0 %v682
        %824 = vmatprep.subr.bf16.mxu0 0
        %825 = vmatpush1.bf16.msra.mxu0 %v687
        %826 = vmatprep.subr.bf16.mxu0 0
        %827 = vmatpush1.bf16.msra.mxu0 0
        %828 = vmatprep.subr.bf16.mxu0 0
        %829 = vmatpush1.bf16.msra.mxu0 0
        %830 = vmatprep.subr.bf16.mxu0 0
        %831 = vmatpush1.bf16.msra.mxu0 0
        %832 = vmatprep.subr.bf16.mxu0 0
        %833 = vmatpush1.bf16.msra.mxu0 0
        %834 = vmatprep.subr.bf16.mxu0 0
        %835 = vmatpush1.bf16.msra.mxu0 0
        %836 = vmatprep.subr.bf16.mxu0 0
        %837 = vmatpush1.bf16.msra.mxu0 0
        %838 = vmatprep.subr.bf16.mxu0 0
        %839 = vmatpush1.bf16.msra.mxu0 0
        %840 = vmatprep.subr.bf16.mxu0 0
        %841 = vmatpush1.bf16.msra.mxu0 0
        %842 = vmatprep.mubr.bf16.mxu0 0
        %843 = vmatmul.mubr.bf16.gmra.mrb[0].mxu0 %v444
        %v844 = vpop.f32.mrb[0].mxu0
        %v845 = vadd.f32 %v514, %v844
        %v846 = vpop.f32.mrb[0].mxu0
        %v847 = vpop.f32.mrb[0].mxu0
        %v848 = vpop.f32.mrb[0].mxu0
        %849 = vdwg.mxu0
        %v850 = vmax.f32 %v763, 0.0
        %v851 = vmax.f32 %v765, 0.0
        %v852 = vmax.f32 %v804, 0.0
        %v853 = vmax.f32 %v806, 0.0
        %v854 = vmax.f32 %v845, 0.0
        %v855 = vpack.c.bf16 %v850, %v850
        %v856 = vpack.c.bf16 %v851, %v851
        %v857 = vpack.c.bf16 %v852, %v852
        %v858 = vpack.c.bf16 %v853, %v853
        %v859 = vpack.c.bf16 %v854, %v854
        %v860 = vld [vmem:[%s5] sm:$0xf]
        %v861 = vld [vmem:[%s5 + $0x4] sm:$0xf]
        %v862 = vld [vmem:[%s5 + $0x8] sm:$0xf]
        %v863 = vld [vmem:[%s5 + $0xc] sm:$0xf]
        %v864 = vld [vmem:[%s5 + $0x10] sm:$0xf]
        %v865 = vld [vmem:[%s5 + $0x14] sm:$0xf]
        %v866 = vld [vmem:[%s5 + $0x18] sm:$0xf]
        %v867 = vld [vmem:[%s5 + $0x1c] sm:$0xf]
        %v868 = vld [vmem:[%s5 + $0x20] sm:$0xf]
        %v869 = vld [vmem:[%s5 + $0x24] sm:$0xf]
        %v870 = vld [vmem:[%s5 + $0x28] sm:$0xf]
        %v871 = vld [vmem:[%s5 + $0x2c] sm:$0xf]
        %v872 = vld [vmem:[%s5 + $0x30] sm:$0xf]
        %v873 = vld [vmem:[%s5 + $0x34] sm:$0xf]
        %v874 = vld [vmem:[%s5 + $0x38] sm:$0xf]
        %v875 = vld [vmem:[%s5 + $0x3c] sm:$0xf]
        %v876 = vld [vmem:[%s5 + $0x40] sm:$0xf]
        %v877 = vld [vmem:[%s5 + $0x44] sm:$0xf]
        %v878 = vld [vmem:[%s5 + $0x48] sm:$0xf]
        %v879 = vld [vmem:[%s5 + $0x4c] sm:$0xf]
        %v880 = vld [vmem:[%s5 + $0x50] sm:$0xf]
        %v881 = vld [vmem:[%s5 + $0x54] sm:$0xf]
        %v882 = vld [vmem:[%s5 + $0x58] sm:$0xf]
        %v883 = vld [vmem:[%s5 + $0x5c] sm:$0xf]
        %v884 = vld [vmem:[%s5 + $0x60] sm:$0xf]
        %v885 = vld [vmem:[%s5 + $0x64] sm:$0xf]
        %v886 = vld [vmem:[%s5 + $0x68] sm:$0xf]
        %v887 = vld [vmem:[%s5 + $0x6c] sm:$0xf]
        %v888 = vld [vmem:[%s5 + $0x70] sm:$0xf]
        %v889 = vld [vmem:[%s5 + $0x74] sm:$0xf]
        %v890 = vld [vmem:[%s5 + $0x78] sm:$0xf]
        %v891 = vld [vmem:[%s5 + $0x7c] sm:$0xf]
        %v892 = vld [vmem:[%s5 + $0x80] sm:$0xf]
        %v893 = vld [vmem:[%s5 + $0x84] sm:$0xf]
        %v894 = vld [vmem:[%s5 + $0x88] sm:$0xf]
        %v895 = vld [vmem:[%s5 + $0x8c] sm:$0xf]
        %v896 = vld [vmem:[%s5 + $0x90] sm:$0xf]
        %v897 = vld [vmem:[%s5 + $0x94] sm:$0xf]
        %v898 = vld [vmem:[%s5 + $0x98] sm:$0xf]
        %v899 = vld [vmem:[%s5 + $0x9c] sm:$0xf]
        %v900 = vld [vmem:[%s5 + $0xa0] sm:$0xf]
        %v901 = vld [vmem:[%s5 + $0xa4] sm:$0xf]
        %v902 = vld [vmem:[%s5 + $0xa8] sm:$0xf]
        %v903 = vld [vmem:[%s5 + $0xac] sm:$0xf]
        %v904 = vld [vmem:[%s5 + $0xb0] sm:$0xf]
        %v905 = vld [vmem:[%s5 + $0xb4] sm:$0xf]
        %v906 = vld [vmem:[%s5 + $0xb8] sm:$0xf]
        %v907 = vld [vmem:[%s5 + $0xbc] sm:$0xf]
        %v908 = vld [vmem:[%s5 + $0xc0] sm:$0xf]
        %v909 = vld [vmem:[%s5 + $0xc4] sm:$0xf]
        %v910 = vld [vmem:[%s5 + $0xc8] sm:$0xf]
        %v911 = vld [vmem:[%s5 + $0xcc] sm:$0xf]
        %v912 = vld [vmem:[%s5 + $0xd0] sm:$0xf]
        %v913 = vld [vmem:[%s5 + $0xd4] sm:$0xf]
        %v914 = vld [vmem:[%s5 + $0xd8] sm:$0xf]
        %v915 = vld [vmem:[%s5 + $0xdc] sm:$0xf]
        %v916 = vld [vmem:[%s5 + $0xe0] sm:$0xf]
        %v917 = vld [vmem:[%s5 + $0xe4] sm:$0xf]
        %v918 = vld [vmem:[%s5 + $0xe8] sm:$0xf]
        %v919 = vld [vmem:[%s5 + $0xec] sm:$0xf]
        %v920 = vld [vmem:[%s5 + $0xf0] sm:$0xf]
        %v921 = vld [vmem:[%s5 + $0xf4] sm:$0xf]
        %v922 = vld [vmem:[%s5 + $0xf8] sm:$0xf]
        %v923 = vld [vmem:[%s5 + $0xfc] sm:$0xf]
        %v924 = vld [vmem:[%s5 + $0x100] sm:$0xf]
        %v925 = vld [vmem:[%s5 + $0x104] sm:$0xf]
        %v926 = vld [vmem:[%s5 + $0x108] sm:$0xf]
        %v927 = vld [vmem:[%s5 + $0x10c] sm:$0xf]
        %v928 = vld [vmem:[%s5 + $0x110] sm:$0xf]
        %v929 = vld [vmem:[%s5 + $0x114] sm:$0xf]
        %v930 = vld [vmem:[%s5 + $0x118] sm:$0xf]
        %v931 = vld [vmem:[%s5 + $0x11c] sm:$0xf]
        %v932 = vld [vmem:[%s6] sm:$0x1]
        %v934 = vlaneseq
        %v935 = vshrl.u32 %v934, 7
        %v936 = vsub.s32 0, %v935
        %v937 = vrot.slane %v932, %v936
        %v1011 = vunpack.c.l.b16 %v860
        %v1012 = vunpack.c.l.b16 %v861
        %v1013 = vunpack.c.l.b16 %v862
        %v1014 = vunpack.c.l.b16 %v863
        %v1015 = vunpack.c.l.b16 %v864
        %v1016 = vunpack.c.l.b16 %v865
        %v1017 = vunpack.c.l.b16 %v866
        %v1018 = vunpack.c.l.b16 %v867
        %v1019 = vunpack.c.l.b16 %v868
        %v1020 = vunpack.c.l.b16 %v869
        %v1021 = vunpack.c.l.b16 %v870
        %v1022 = vunpack.c.l.b16 %v871
        %v1023 = vunpack.c.l.b16 %v872
        %v1024 = vunpack.c.l.b16 %v873
        %v1025 = vunpack.c.l.b16 %v874
        %v1026 = vunpack.c.l.b16 %v875
        %v1027 = vunpack.c.l.b16 %v876
        %v1028 = vunpack.c.l.b16 %v877
        %v1029 = vunpack.c.l.b16 %v878
        %v1030 = vunpack.c.l.b16 %v879
        %v1031 = vunpack.c.l.b16 %v880
        %v1032 = vunpack.c.l.b16 %v881
        %v1033 = vunpack.c.l.b16 %v882
        %v1034 = vunpack.c.l.b16 %v883
        %v1035 = vunpack.c.l.b16 %v884
        %v1036 = vunpack.c.l.b16 %v885
        %v1037 = vunpack.c.l.b16 %v886
        %v1038 = vunpack.c.l.b16 %v887
        %v1039 = vunpack.c.l.b16 %v888
        %v1040 = vunpack.c.l.b16 %v889
        %v1041 = vunpack.c.l.b16 %v890
        %v1042 = vunpack.c.l.b16 %v891
        %v1043 = vunpack.c.l.b16 %v892
        %v1044 = vunpack.c.l.b16 %v893
        %v1045 = vunpack.c.l.b16 %v894
        %v1046 = vunpack.c.l.b16 %v895
        %v1047 = vunpack.c.l.b16 %v896
        %v1048 = vunpack.c.l.b16 %v897
        %v1049 = vunpack.c.l.b16 %v898
        %v1050 = vunpack.c.l.b16 %v899
        %v1051 = vunpack.c.l.b16 %v900
        %v1052 = vunpack.c.l.b16 %v901
        %v1053 = vunpack.c.l.b16 %v902
        %v1054 = vunpack.c.l.b16 %v903
        %v1055 = vunpack.c.l.b16 %v904
        %v1056 = vunpack.c.l.b16 %v905
        %v1057 = vunpack.c.l.b16 %v906
        %v1058 = vunpack.c.l.b16 %v907
        %v1059 = vunpack.c.l.b16 %v908
        %v1060 = vunpack.c.l.b16 %v909
        %v1061 = vunpack.c.l.b16 %v910
        %v1062 = vunpack.c.l.b16 %v911
        %v1063 = vunpack.c.l.b16 %v912
        %v1064 = vunpack.c.l.b16 %v913
        %v1065 = vunpack.c.l.b16 %v914
        %v1066 = vunpack.c.l.b16 %v915
        %v1067 = vunpack.c.l.b16 %v916
        %v1068 = vunpack.c.l.b16 %v917
        %v1069 = vunpack.c.l.b16 %v918
        %v1070 = vunpack.c.l.b16 %v919
        %v1071 = vunpack.c.l.b16 %v920
        %v1072 = vunpack.c.l.b16 %v921
        %v1073 = vunpack.c.l.b16 %v922
        %v1074 = vunpack.c.l.b16 %v923
        %v1075 = vunpack.c.l.b16 %v924
        %v1076 = vunpack.c.l.b16 %v925
        %v1077 = vunpack.c.l.b16 %v926
        %v1078 = vunpack.c.l.b16 %v927
        %v1079 = vunpack.c.l.b16 %v928
        %v1080 = vunpack.c.l.b16 %v929
        %v1081 = vunpack.c.l.b16 %v930
        %v1082 = vunpack.c.l.b16 %v931
        %v1083 = vpack.c.b16 %v1012, %v1011
        %v1084 = vpack.c.b16 %v1014, %v1013
        %v1085 = vpack.c.b16 %v1016, %v1015
        %v1086 = vpack.c.b16 %v1018, %v1017
        %v1087 = vpack.c.b16 %v1020, %v1019
        %v1088 = vpack.c.b16 %v1022, %v1021
        %v1089 = vpack.c.b16 %v1024, %v1023
        %v1090 = vpack.c.b16 %v1026, %v1025
        %v1091 = vpack.c.b16 %v1028, %v1027
        %v1092 = vpack.c.b16 %v1030, %v1029
        %v1093 = vpack.c.b16 %v1032, %v1031
        %v1094 = vpack.c.b16 %v1034, %v1033
        %v1095 = vpack.c.b16 %v1036, %v1035
        %v1096 = vpack.c.b16 %v1038, %v1037
        %v1097 = vpack.c.b16 %v1040, %v1039
        %v1098 = vpack.c.b16 %v1042, %v1041
        %v1099 = vpack.c.b16 %v1044, %v1043
        %v1100 = vpack.c.b16 %v1046, %v1045
        %v1101 = vpack.c.b16 %v1048, %v1047
        %v1102 = vpack.c.b16 %v1050, %v1049
        %v1103 = vpack.c.b16 %v1052, %v1051
        %v1104 = vpack.c.b16 %v1054, %v1053
        %v1105 = vpack.c.b16 %v1056, %v1055
        %v1106 = vpack.c.b16 %v1058, %v1057
        %v1107 = vpack.c.b16 %v1060, %v1059
        %v1108 = vpack.c.b16 %v1062, %v1061
        %v1109 = vpack.c.b16 %v1064, %v1063
        %v1110 = vpack.c.b16 %v1066, %v1065
        %v1111 = vpack.c.b16 %v1068, %v1067
        %v1112 = vpack.c.b16 %v1070, %v1069
        %v1113 = vpack.c.b16 %v1072, %v1071
        %v1114 = vpack.c.b16 %v1074, %v1073
        %v1115 = vpack.c.b16 %v1076, %v1075
        %v1116 = vpack.c.b16 %v1078, %v1077
        %v1117 = vpack.c.b16 %v1080, %v1079
        %v1118 = vpack.c.b16 %v1082, %v1081
        %vm1155 = vcmask 523264
        %v1157 = vsel %vm1155, %v859, 0
        %1159 = vmatprep.subr.bf16.mxu0 0
        %1160 = vmatpush1.bf16.msra.mxu0 %v1083
        %1161 = vmatprep.subr.bf16.mxu0 0
        %1162 = vmatpush1.bf16.msra.mxu0 %v1084
        %1163 = vmatprep.subr.bf16.mxu0 0
        %1164 = vmatpush1.bf16.msra.mxu0 %v1085
        %1165 = vmatprep.subr.bf16.mxu0 0
        %1166 = vmatpush1.bf16.msra.mxu0 %v1086
        %1167 = vmatprep.subr.bf16.mxu0 0
        %1168 = vmatpush1.bf16.msra.mxu0 %v1087
        %1169 = vmatprep.subr.bf16.mxu0 0
        %1170 = vmatpush1.bf16.msra.mxu0 %v1088
        %1171 = vmatprep.subr.bf16.mxu0 0
        %1172 = vmatpush1.bf16.msra.mxu0 %v1089
        %1173 = vmatprep.subr.bf16.mxu0 0
        %1174 = vmatpush1.bf16.msra.mxu0 %v1090
        %1175 = vmatprep.subr.bf16.mxu0 0
        %1176 = vmatpush1.bf16.msra.mxu0 %v1091
        %1177 = vmatprep.subr.bf16.mxu0 0
        %1178 = vmatpush1.bf16.msra.mxu0 %v1092
        %1179 = vmatprep.subr.bf16.mxu0 0
        %1180 = vmatpush1.bf16.msra.mxu0 %v1093
        %1181 = vmatprep.subr.bf16.mxu0 0
        %1182 = vmatpush1.bf16.msra.mxu0 %v1094
        %1183 = vmatprep.subr.bf16.mxu0 0
        %1184 = vmatpush1.bf16.msra.mxu0 %v1095
        %1185 = vmatprep.subr.bf16.mxu0 0
        %1186 = vmatpush1.bf16.msra.mxu0 %v1096
        %1187 = vmatprep.subr.bf16.mxu0 0
        %1188 = vmatpush1.bf16.msra.mxu0 %v1097
        %1189 = vmatprep.subr.bf16.mxu0 0
        %1190 = vmatpush1.bf16.msra.mxu0 %v1098
        %1191 = vmatprep.mubr.bf16.mxu0 %v856
        %1192 = vmatmul.mubr.bf16.gmra.mrb[0].mxu0 %v855
        %v1193 = vpop.f32.mrb[0].mxu0
        %v1194 = vadd.f32 %v937, %v1193
        %v1195 = vpop.f32.mrb[0].mxu0
        %v1196 = vpop.f32.mrb[0].mxu0
        %v1197 = vpop.f32.mrb[0].mxu0
        %1198 = vdwg.mxu0
        %1199 = vmatprep.subr.bf16.mxu0 0
        %1200 = vmatpush1.bf16.msra.mxu0 %v1099
        %1201 = vmatprep.subr.bf16.mxu0 0
        %1202 = vmatpush1.bf16.msra.mxu0 %v1100
        %1203 = vmatprep.subr.bf16.mxu0 0
        %1204 = vmatpush1.bf16.msra.mxu0 %v1101
        %1205 = vmatprep.subr.bf16.mxu0 0
        %1206 = vmatpush1.bf16.msra.mxu0 %v1102
        %1207 = vmatprep.subr.bf16.mxu0 0
        %1208 = vmatpush1.bf16.msra.mxu0 %v1103
        %1209 = vmatprep.subr.bf16.mxu0 0
        %1210 = vmatpush1.bf16.msra.mxu0 %v1104
        %1211 = vmatprep.subr.bf16.mxu0 0
        %1212 = vmatpush1.bf16.msra.mxu0 %v1105
        %1213 = vmatprep.subr.bf16.mxu0 0
        %1214 = vmatpush1.bf16.msra.mxu0 %v1106
        %1215 = vmatprep.subr.bf16.mxu0 0
        %1216 = vmatpush1.bf16.msra.mxu0 %v1107
        %1217 = vmatprep.subr.bf16.mxu0 0
        %1218 = vmatpush1.bf16.msra.mxu0 %v1108
        %1219 = vmatprep.subr.bf16.mxu0 0
        %1220 = vmatpush1.bf16.msra.mxu0 %v1109
        %1221 = vmatprep.subr.bf16.mxu0 0
        %1222 = vmatpush1.bf16.msra.mxu0 %v1110
        %1223 = vmatprep.subr.bf16.mxu0 0
        %1224 = vmatpush1.bf16.msra.mxu0 %v1111
        %1225 = vmatprep.subr.bf16.mxu0 0
        %1226 = vmatpush1.bf16.msra.mxu0 %v1112
        %1227 = vmatprep.subr.bf16.mxu0 0
        %1228 = vmatpush1.bf16.msra.mxu0 %v1113
        %1229 = vmatprep.subr.bf16.mxu0 0
        %1230 = vmatpush1.bf16.msra.mxu0 %v1114
        %1231 = vmatprep.mubr.bf16.mxu0 %v858
        %1232 = vmatmul.mubr.bf16.gmra.mrb[0].mxu0 %v857
        %v1233 = vpop.f32.mrb[0].mxu0
        %v1234 = vadd.f32 %v1194, %v1233
        %v1235 = vpop.f32.mrb[0].mxu0
        %v1236 = vpop.f32.mrb[0].mxu0
        %v1237 = vpop.f32.mrb[0].mxu0
        %1238 = vdwg.mxu0
        %1239 = vmatprep.subr.bf16.mxu0 0
        %1240 = vmatpush1.bf16.msra.mxu0 %v1115
        %1241 = vmatprep.subr.bf16.mxu0 0
        %1242 = vmatpush1.bf16.msra.mxu0 %v1116
        %1243 = vmatprep.subr.bf16.mxu0 0
        %1244 = vmatpush1.bf16.msra.mxu0 %v1117
        %1245 = vmatprep.subr.bf16.mxu0 0
        %1246 = vmatpush1.bf16.msra.mxu0 %v1118
        %1247 = vmatprep.subr.bf16.mxu0 0
        %1248 = vmatpush1.bf16.msra.mxu0 0
        %1249 = vmatprep.subr.bf16.mxu0 0
        %1250 = vmatpush1.bf16.msra.mxu0 0
        %1251 = vmatprep.subr.bf16.mxu0 0
        %1252 = vmatpush1.bf16.msra.mxu0 0
        %1253 = vmatprep.subr.bf16.mxu0 0
        %1254 = vmatpush1.bf16.msra.mxu0 0
        %1255 = vmatprep.subr.bf16.mxu0 0
        %1256 = vmatpush1.bf16.msra.mxu0 0
        %1257 = vmatprep.subr.bf16.mxu0 0
        %1258 = vmatpush1.bf16.msra.mxu0 0
        %1259 = vmatprep.subr.bf16.mxu0 0
        %1260 = vmatpush1.bf16.msra.mxu0 0
        %1261 = vmatprep.subr.bf16.mxu0 0
        %1262 = vmatpush1.bf16.msra.mxu0 0
        %1263 = vmatprep.subr.bf16.mxu0 0
        %1264 = vmatpush1.bf16.msra.mxu0 0
        %1265 = vmatprep.subr.bf16.mxu0 0
        %1266 = vmatpush1.bf16.msra.mxu0 0
        %1267 = vmatprep.subr.bf16.mxu0 0
        %1268 = vmatpush1.bf16.msra.mxu0 0
        %1269 = vmatprep.subr.bf16.mxu0 0
        %1270 = vmatpush1.bf16.msra.mxu0 0
        %1271 = vmatprep.mubr.bf16.mxu0 0
        %1272 = vmatmul.mubr.bf16.gmra.mrb[0].mxu0 %v1157
        %v1273 = vpop.f32.mrb[0].mxu0
        %v1274 = vadd.f32 %v1234, %v1273
        %v1275 = vpop.f32.mrb[0].mxu0
        %v1276 = vpop.f32.mrb[0].mxu0
        %v1277 = vpop.f32.mrb[0].mxu0
        %1278 = vdwg.mxu0
        %v1279 = vld [vmem:[%s432] sm:$0xff]
        %v1280 = vunpack.c.l.bf16 %v1279
        %v1281 = vunpack.c.h.bf16 %v1279
        %v1282 = vmul.f32 %v804, 1.442695
        %v1283 = vpow.pop %v1282
        %v1284 = vmul.f32 %v806, 1.442695
        %v1285 = vpow.pop %v1284
        %v1286 = vmul.f32 %v1283, %v1280
        %v1287 = vmul.f32 %v1285, %v1281
        %v1288 = vadd.f32 %v763, %v1286
        %v1289 = vadd.f32 %v765, %v1287
        %v1290 = vpack.c.bf16 %v1288, %v1288
        %v1291 = vpack.c.bf16 %v1289, %v1289
        %v1292 = vld [vmem:[%s7] sm:$0xf]
        %v1293 = vld [vmem:[%s7 + $0x4] sm:$0xf]
        %v1294 = vld [vmem:[%s7 + $0x8] sm:$0xf]
        %v1295 = vld [vmem:[%s7 + $0xc] sm:$0xf]
        %v1296 = vld [vmem:[%s7 + $0x10] sm:$0xf]
        %v1297 = vld [vmem:[%s7 + $0x14] sm:$0xf]
        %v1298 = vld [vmem:[%s7 + $0x18] sm:$0xf]
        %v1299 = vld [vmem:[%s7 + $0x1c] sm:$0xf]
        %v1300 = vld [vmem:[%s7 + $0x20] sm:$0xf]
        %v1301 = vld [vmem:[%s7 + $0x24] sm:$0xf]
        %v1302 = vld [vmem:[%s7 + $0x28] sm:$0xf]
        %v1303 = vld [vmem:[%s7 + $0x2c] sm:$0xf]
        %v1304 = vld [vmem:[%s7 + $0x30] sm:$0xf]
        %v1305 = vld [vmem:[%s7 + $0x34] sm:$0xf]
        %v1306 = vld [vmem:[%s7 + $0x38] sm:$0xf]
        %v1307 = vld [vmem:[%s7 + $0x3c] sm:$0xf]
        %v1308 = vld [vmem:[%s7 + $0x40] sm:$0xf]
        %v1309 = vld [vmem:[%s7 + $0x44] sm:$0xf]
        %v1310 = vld [vmem:[%s7 + $0x48] sm:$0xf]
        %v1311 = vld [vmem:[%s7 + $0x4c] sm:$0xf]
        %v1312 = vld [vmem:[%s7 + $0x50] sm:$0xf]
        %v1313 = vld [vmem:[%s7 + $0x54] sm:$0xf]
        %v1314 = vld [vmem:[%s7 + $0x58] sm:$0xf]
        %v1315 = vld [vmem:[%s7 + $0x5c] sm:$0xf]
        %v1316 = vld [vmem:[%s7 + $0x60] sm:$0xf]
        %v1317 = vld [vmem:[%s7 + $0x64] sm:$0xf]
        %v1318 = vld [vmem:[%s7 + $0x68] sm:$0xf]
        %v1319 = vld [vmem:[%s7 + $0x6c] sm:$0xf]
        %v1320 = vld [vmem:[%s7 + $0x70] sm:$0xf]
        %v1321 = vld [vmem:[%s7 + $0x74] sm:$0xf]
        %v1322 = vld [vmem:[%s7 + $0x78] sm:$0xf]
        %v1323 = vld [vmem:[%s7 + $0x7c] sm:$0xf]
        %v1324 = vld [vmem:[%s8] sm:$0x1]
        %v1326 = vlaneseq
        %v1327 = vshrl.u32 %v1326, 7
        %v1328 = vsub.s32 0, %v1327
        %v1329 = vrot.slane %v1324, %v1328
        %v1363 = vunpack.c.l.b16 %v1292
        %v1364 = vunpack.c.l.b16 %v1293
        %v1365 = vunpack.c.l.b16 %v1294
        %v1366 = vunpack.c.l.b16 %v1295
        %v1367 = vunpack.c.l.b16 %v1296
        %v1368 = vunpack.c.l.b16 %v1297
        %v1369 = vunpack.c.l.b16 %v1298
        %v1370 = vunpack.c.l.b16 %v1299
        %v1371 = vunpack.c.l.b16 %v1300
        %v1372 = vunpack.c.l.b16 %v1301
        %v1373 = vunpack.c.l.b16 %v1302
        %v1374 = vunpack.c.l.b16 %v1303
        %v1375 = vunpack.c.l.b16 %v1304
        %v1376 = vunpack.c.l.b16 %v1305
        %v1377 = vunpack.c.l.b16 %v1306
        %v1378 = vunpack.c.l.b16 %v1307
        %v1379 = vunpack.c.l.b16 %v1308
        %v1380 = vunpack.c.l.b16 %v1309
        %v1381 = vunpack.c.l.b16 %v1310
        %v1382 = vunpack.c.l.b16 %v1311
        %v1383 = vunpack.c.l.b16 %v1312
        %v1384 = vunpack.c.l.b16 %v1313
        %v1385 = vunpack.c.l.b16 %v1314
        %v1386 = vunpack.c.l.b16 %v1315
        %v1387 = vunpack.c.l.b16 %v1316
        %v1388 = vunpack.c.l.b16 %v1317
        %v1389 = vunpack.c.l.b16 %v1318
        %v1390 = vunpack.c.l.b16 %v1319
        %v1391 = vunpack.c.l.b16 %v1320
        %v1392 = vunpack.c.l.b16 %v1321
        %v1393 = vunpack.c.l.b16 %v1322
        %v1394 = vunpack.c.l.b16 %v1323
        %v1395 = vpack.c.b16 %v1364, %v1363
        %v1396 = vpack.c.b16 %v1366, %v1365
        %v1397 = vpack.c.b16 %v1368, %v1367
        %v1398 = vpack.c.b16 %v1370, %v1369
        %v1399 = vpack.c.b16 %v1372, %v1371
        %v1400 = vpack.c.b16 %v1374, %v1373
        %v1401 = vpack.c.b16 %v1376, %v1375
        %v1402 = vpack.c.b16 %v1378, %v1377
        %v1403 = vpack.c.b16 %v1380, %v1379
        %v1404 = vpack.c.b16 %v1382, %v1381
        %v1405 = vpack.c.b16 %v1384, %v1383
        %v1406 = vpack.c.b16 %v1386, %v1385
        %v1407 = vpack.c.b16 %v1388, %v1387
        %v1408 = vpack.c.b16 %v1390, %v1389
        %v1409 = vpack.c.b16 %v1392, %v1391
        %v1410 = vpack.c.b16 %v1394, %v1393
        %1427 = vmatprep.subr.bf16.mxu0 0
        %1428 = vmatpush1.bf16.msra.mxu0 %v1395
        %1429 = vmatprep.subr.bf16.mxu0 0
        %1430 = vmatpush1.bf16.msra.mxu0 %v1396
        %1431 = vmatprep.subr.bf16.mxu0 0
        %1432 = vmatpush1.bf16.msra.mxu0 %v1397
        %1433 = vmatprep.subr.bf16.mxu0 0
        %1434 = vmatpush1.bf16.msra.mxu0 %v1398
        %1435 = vmatprep.subr.bf16.mxu0 0
        %1436 = vmatpush1.bf16.msra.mxu0 %v1399
        %1437 = vmatprep.subr.bf16.mxu0 0
        %1438 = vmatpush1.bf16.msra.mxu0 %v1400
        %1439 = vmatprep.subr.bf16.mxu0 0
        %1440 = vmatpush1.bf16.msra.mxu0 %v1401
        %1441 = vmatprep.subr.bf16.mxu0 0
        %1442 = vmatpush1.bf16.msra.mxu0 %v1402
        %1443 = vmatprep.subr.bf16.mxu0 0
        %1444 = vmatpush1.bf16.msra.mxu0 %v1403
        %1445 = vmatprep.subr.bf16.mxu0 0
        %1446 = vmatpush1.bf16.msra.mxu0 %v1404
        %1447 = vmatprep.subr.bf16.mxu0 0
        %1448 = vmatpush1.bf16.msra.mxu0 %v1405
        %1449 = vmatprep.subr.bf16.mxu0 0
        %1450 = vmatpush1.bf16.msra.mxu0 %v1406
        %1451 = vmatprep.subr.bf16.mxu0 0
        %1452 = vmatpush1.bf16.msra.mxu0 %v1407
        %1453 = vmatprep.subr.bf16.mxu0 0
        %1454 = vmatpush1.bf16.msra.mxu0 %v1408
        %1455 = vmatprep.subr.bf16.mxu0 0
        %1456 = vmatpush1.bf16.msra.mxu0 %v1409
        %1457 = vmatprep.subr.bf16.mxu0 0
        %1458 = vmatpush1.bf16.msra.mxu0 %v1410
        %1459 = vmatprep.mubr.bf16.mxu0 %v1291
        %1460 = vmatmul.mubr.bf16.gmra.mrb[0].mxu0 %v1290
        %v1461 = vpop.f32.mrb[0].mxu0
        %v1462 = vadd.f32 %v1329, %v1461
        %v1463 = vpop.f32.mrb[0].mxu0
        %v1464 = vpop.f32.mrb[0].mxu0
        %v1465 = vpop.f32.mrb[0].mxu0
        %1466 = vdwg.mxu0
        %1467 = vst [vmem:[%s408] sm:$0xff] %v1462
        %1468 = vst [vmem:[%s415] sm:$0xff] %v1274
        %v1469 = vsel %vm443, 1, 0
        %1470 = vset.pattern.permute.xlu0 0
        %1471 = vperm.xlu0 %1470, %v1469
        %v1472 = vpop.permute.xlu0 %1471
        %vm1473 = vcmp.eq.s32.totalorder %v1472, 1
        %v1474 = vsel %vm1473, %v1274, %v440
        %1475 = vst [vmem:[#allocation2] sm:$0xff] %v1474
        %s1476 = sand.u32 %s256, 1
        %s1477 = scalar_lea.sflag [#allocation4], %s1476
        %s1478 = sand.u32 %s256, 1
        %s1479 = smul.addr %s1478, 8
        %s1480 = scalar_lea.vmem [#allocation3], %s1479
        %s1481 = sand.u32 %s284, 1
        %s1482 = scalar_lea.sflag [#allocation6], %s1481
        %s1483 = sand.u32 %s284, 1
        %s1484 = smul.addr %s1483, 8
        %s1485 = scalar_lea.vmem [#allocation5], %s1484
        // Predicated region
        $region61: #{tpu_custom_call.1} parent=55 // pred_check
          %p1486 = pneg %p266
        $region62: #{tpu_custom_call.1} parent=55 // pred_check_branch
          %1488 = sbr.rel (%p1486) target = $region64
        $region63: #{tpu_custom_call.1} parent=55 // pred_region
          %s1490 = ssub.s32 128, 128
          %1491 = vsyncadd %s1477, %s1490
          %s1492 = sadd.s32 %s32, %s33
          %s1493 = smul.addr %s1492, 128
          %s1494 = scalar_lea.hbm %s9, %s1493
          %s1496 = sshll.u32 %s1480, 4
          %s1497 = int_to_ptr.vmem [resolvable:$true] %s1496
          %1499 = dma.vmem_to_hbm [thread:$0]  %s1497, 128, %s1494, %s1477
        $region64: #{tpu_custom_call.1} parent=55 // pred_fallthru
          _
        // Predicated region
        $region65: #{tpu_custom_call.1} parent=55 // pred_check
          %p1500 = pneg %p294
        $region66: #{tpu_custom_call.1} parent=55 // pred_check_branch
          %1502 = sbr.rel (%p1500) target = $region68
        $region67: #{tpu_custom_call.1} parent=55 // pred_region
          %s1504 = ssub.s32 128, 128
          %1505 = vsyncadd %s1482, %s1504
          %s1506 = sadd.s32 %s32, %s33
          %s1507 = smul.addr %s1506, 128
          %s1508 = scalar_lea.hbm %s10, %s1507
          %s1510 = sshll.u32 %s1485, 4
          %s1511 = int_to_ptr.vmem [resolvable:$true] %s1510
          %1513 = dma.vmem_to_hbm [thread:$0]  %s1511, 128, %s1508, %s1482
        $region68: #{tpu_custom_call.1} parent=55 // pred_fallthru
          _
      $region56: #{tpu_custom_call.1} parent=5 // pred_fallthru
        _
      %p1514 = scmp.le.s32.totalorder 2, %s23
      // Predicated region
      $region69: #{tpu_custom_call.1} parent=5 // pred_check
        %p1515 = pneg %p1514
      $region70: #{tpu_custom_call.1} parent=5 // pred_check_branch
        %1517 = sbr.rel (%p1515) target = $region72
      $region71: #{tpu_custom_call.1} parent=5 // pred_region
        %s1518 = ssub.s32 %s23, 2
        // Predicated region
        $region73: #{tpu_custom_call.1} parent=71 // pred_check
          %p1519 = pneg %p272
        $region74: #{tpu_custom_call.1} parent=71 // pred_check_branch
          %1521 = sbr.rel (%p1519) target = $region76
        $region75: #{tpu_custom_call.1} parent=71 // pred_region
          %s1522 = sand.u32 %s257, 1
          %s1523 = scalar_lea.sflag [#allocation4], %s1522
          %s1524 = sand.u32 %s257, 1
          %s1525 = smul.addr %s1524, 8
          %s1526 = scalar_lea.vmem [#allocation3], %s1525
          %1527 = dma.done %s1523, 128
        $region76: #{tpu_custom_call.1} parent=71 // pred_fallthru
          _
        // Predicated region
        $region77: #{tpu_custom_call.1} parent=71 // pred_check
          %p1528 = pneg %p300
        $region78: #{tpu_custom_call.1} parent=71 // pred_check_branch
          %1530 = sbr.rel (%p1528) target = $region80
        $region79: #{tpu_custom_call.1} parent=71 // pred_region
          %s1531 = sand.u32 %s285, 1
          %s1532 = scalar_lea.sflag [#allocation6], %s1531
          %s1533 = sand.u32 %s285, 1
          %s1534 = smul.addr %s1533, 8
          %s1535 = scalar_lea.vmem [#allocation5], %s1534
          %1536 = dma.done %s1532, 128
        $region80: #{tpu_custom_call.1} parent=71 // pred_fallthru
          _
      $region72: #{tpu_custom_call.1} parent=5 // pred_fallthru
        _
    $region6: #{tpu_custom_call.1} parent=1 // loop_footer
      %s27 = sadd.s32 1, %s23
    $region7: #{tpu_custom_call.1} parent=1 // loop_footer_branch
      %22 = sbr.rel target = $region3
    $region8: #{tpu_custom_call.1} parent=1 // loop_exit
      _
    %1537 = vsyncpa [#allocation4], 1
    %s1538 = scalar_lea.sflag [#allocation4], 1
    %1539 = vsyncpa %s1538, 1
    %1540 = vsyncpa [#allocation6], 1
    %s1541 = scalar_lea.sflag [#allocation6], 1
    %1542 = vsyncpa %s1541, 1

</llo_original>
